<compile_context>
chip_gen: v7x
topology: tpu7x:2x2x1
jax: 0.10.0
libtpu: 0.0.40
codegen_flags: <defaults>
</compile_context>

<pallas_src>
import functools

import jax
import jax.numpy as jnp
from jax import lax
from jax.experimental import pallas as pl
from jax.experimental.pallas import tpu as pltpu


def _sdpa_dropout_kernel(params_ref, thresh_ref, q_ref, k_ref, v_ref, bits_ref,
                         o_ref, m_sc, l_sc, acc_sc):
    """Flash-style SDPA + dropout. Grid = (batch, q-tiles, k-tiles)."""
    j = pl.program_id(2)

    @pl.when(j == 0)
    def _init():
        m_sc[...] = jnp.full_like(m_sc, -jnp.inf)
        l_sc[...] = jnp.zeros_like(l_sc)
        acc_sc[...] = jnp.zeros_like(acc_sc)

    # Fold the 1/inv_scale_factor scaling into q (Lq*D mults instead of Lq*Lk).
    scale = params_ref[0]
    q = (q_ref[0] * scale).astype(jnp.bfloat16)        # (tq, D)
    k = k_ref[0].astype(jnp.bfloat16)                  # (tk, D)

    # scores: (tq, tk); bf16 operands, f32 accumulation on the MXU.
    s = lax.dot_general(q, k, (((1,), (1,)), ((), ())),
                        preferred_element_type=jnp.float32)

    m_prev = m_sc[...]
    m_new = jnp.maximum(m_prev, jnp.max(s, axis=-1, keepdims=True))
    alpha = jnp.exp(m_prev - m_new)
    p = jnp.exp(s - m_new)

    # softmax denominator uses the *unmasked* probabilities.
    l_sc[...] = alpha * l_sc[...] + jnp.sum(p, axis=-1, keepdims=True)

    # dropout: single integer compare per element (bits and threshold both mapped
    # to the signed-int32 domain on the host).
    keep = bits_ref[0] >= thresh_ref[0]
    p_kept = jnp.where(keep, p, 0.0).astype(jnp.bfloat16)

    acc_sc[...] = alpha * acc_sc[...] + lax.dot_general(
        p_kept, v_ref[0].astype(jnp.bfloat16), (((1,), (0,)), ((), ())),
        preferred_element_type=jnp.float32)
    m_sc[...] = m_new

    @pl.when(j == pl.num_programs(2) - 1)
    def _finalize():
        keep_scale = params_ref[1]                        # 1/(1-p)
        inv_l = pl.reciprocal(l_sc[...], approx=True)     # EUP slot
        o_ref[0] = (acc_sc[...] * (inv_l * keep_scale)).astype(o_ref.dtype)


@functools.partial(jax.jit,
                   static_argnames=("inv_scale_factor", "dropout_p", "tq", "tk"))
def sdpa_dropout(query, key, value, rng_key, *, inv_scale_factor, dropout_p,
                 tq=128, tk=128):
    B, Lq, D = query.shape
    _, Lk, Dk = key.shape
    _, _, Dv = value.shape
    assert Dk == D, "query/key feature dims must match for QK^T"
    assert value.shape[1] == Lk

    # Tile sizes: 128-granular when divisible, otherwise full extent
    # (full-extent blocks are always legal w.r.t. the (8,128) rule).
    tq = tq if (tq <= Lq and Lq % tq == 0) else Lq
    tk = tk if (tk <= Lk and Lk % tk == 0) else Lk
    grid = (B, Lq // tq, Lk // tk)

    p = float(dropout_p)
    keep_scale = 1.0 / (1.0 - p) if p < 1.0 else 0.0
    # drop iff uniform-u32 bits < round(p * 2^32); map both sides to signed int32
    # (u - 2^31) so the in-kernel compare is a plain s32 >=.
    thresh_u = min(int(round(p * 4294967296.0)), 4294967295)
    thresh_i = thresh_u - 2147483648

    params = jnp.asarray([1.0 / float(inv_scale_factor), keep_scale], jnp.float32)
    thresh = jnp.asarray([thresh_i], jnp.int32)

    # TODO(synk): dropout mask uses a JAX PRNG stream, not PyTorch's RNG stream.
    bits_u32 = jax.random.bits(rng_key, (B, Lq, Lk), dtype=jnp.uint32)
    bits_i32 = lax.bitcast_convert_type(bits_u32 ^ jnp.uint32(0x80000000), jnp.int32)

    out = pl.pallas_call(
        _sdpa_dropout_kernel,
        out_shape=jax.ShapeDtypeStruct((B, Lq, Dv), query.dtype),
        grid=grid,
        in_specs=[
            pl.BlockSpec(memory_space=pltpu.MemorySpace.SMEM),      # params [scale, keep_scale]
            pl.BlockSpec(memory_space=pltpu.MemorySpace.SMEM),      # dropout threshold (s32)
            pl.BlockSpec((1, tq, D), lambda b, i, j: (b, i, 0)),    # query tile
            pl.BlockSpec((1, tk, D), lambda b, i, j: (b, j, 0)),    # key tile
            pl.BlockSpec((1, tk, Dv), lambda b, i, j: (b, j, 0)),   # value tile
            pl.BlockSpec((1, tq, tk), lambda b, i, j: (b, i, j)),   # dropout bits tile
        ],
        out_specs=pl.BlockSpec((1, tq, Dv), lambda b, i, j: (b, i, 0)),
        scratch_shapes=[
            pltpu.VMEM((tq, 1), jnp.float32),    # running max
            pltpu.VMEM((tq, 1), jnp.float32),    # running softmax denom
            pltpu.VMEM((tq, Dv), jnp.float32),   # output accumulator
        ],
        compiler_params=pltpu.CompilerParams(
            dimension_semantics=("parallel", "parallel", "arbitrary"),
            vmem_limit_bytes=64 * 1024 * 1024,
        ),
    )(params, thresh, query, key, value, bits_i32)
    return out


def _reference_p0(query, key, value, inv_scale_factor):
    # Pure-JAX reference at dropout_p = 0, mirroring the kernel's bf16 casts so
    # the comparison isolates implementation errors rather than precision.
    scale = 1.0 / float(inv_scale_factor)
    q = (query.astype(jnp.float32) * scale).astype(jnp.bfloat16).astype(jnp.float32)
    k = key.astype(jnp.bfloat16).astype(jnp.float32)
    v = value.astype(jnp.bfloat16).astype(jnp.float32)
    s = jnp.einsum("bqd,bkd->bqk", q, k)
    m = jnp.max(s, axis=-1, keepdims=True)
    e = jnp.exp(s - m)
    l = jnp.sum(e, axis=-1, keepdims=True)
    p_bf = e.astype(jnp.bfloat16).astype(jnp.float32)
    return jnp.einsum("bqk,bkd->bqd", p_bf, v) / l


if __name__ == "__main__":
    # Small but lane-dense shapes (Lk and Dv multiples of 128, two k-tiles so the
    # online-softmax accumulation path is exercised).
    B, Lq, Lk, D, Dv = 2, 128, 256, 64, 128
    root = jax.random.PRNGKey(0)
    kq, kk, kv, kd = jax.random.split(root, 4)
    query = jax.random.normal(kq, (B, Lq, D), dtype=jnp.float32)
    key = jax.random.normal(kk, (B, Lk, D), dtype=jnp.float32)
    value = jax.random.normal(kv, (B, Lk, Dv), dtype=jnp.float32)

    inv_scale_factor = 8.0   # ~sqrt(D)
    dropout_p = 0.0          # deterministic path; dropout compare still runs in-kernel

    out = sdpa_dropout(query, key, value, kd,
                       inv_scale_factor=inv_scale_factor, dropout_p=dropout_p)
    out = jax.block_until_ready(out)

    ref = _reference_p0(query, key, value, inv_scale_factor)
    assert out.shape == (B, Lq, Dv)
    max_err = float(jnp.max(jnp.abs(out - ref)))
    assert jnp.allclose(out, ref, atol=2e-2, rtol=2e-2), (
        f"mismatch vs reference (max abs err {max_err})")

    print("KERNEL_OK")
</pallas_src>

<mosaic_0001>
module attributes {stable_mosaic.version = 11 : i64} {
  func.func @_sdpa_dropout_kernel(%arg0: i32, %arg1: i32, %arg2: i32, %arg3: memref<2xf32, #tpu.memory_space<smem>>, %arg4: memref<1xi32, #tpu.memory_space<smem>>, %arg5: memref<1x128x64xf32, #tpu.memory_space<vmem>>, %arg6: memref<1x128x64xf32, #tpu.memory_space<vmem>>, %arg7: memref<1x128x128xf32, #tpu.memory_space<vmem>>, %arg8: memref<1x128x128xi32, #tpu.memory_space<vmem>>, %arg9: memref<1x128x128xf32, #tpu.memory_space<vmem>>, %arg10: memref<128x1xf32, #tpu.memory_space<vmem>>, %arg11: memref<128x1xf32, #tpu.memory_space<vmem>>, %arg12: memref<128x128xf32, #tpu.memory_space<vmem>>) attributes {dimension_semantics = [#tpu.dimension_semantics<parallel>, #tpu.dimension_semantics<parallel>, #tpu.dimension_semantics<arbitrary>], iteration_bounds = array<i64: 2, 1, 2>, scalar_prefetch = 0 : i64, scratch_operands = 3 : i64, tpu.core_type = #tpu.core_type<tc>, window_params = [{transform_indices = @transform_0, window_bounds = array<i64: 2>}, {transform_indices = @transform_1, window_bounds = array<i64: 1>}, {transform_indices = @transform_2, window_bounds = array<i64: 1, 128, 64>}, {transform_indices = @transform_3, window_bounds = array<i64: 1, 128, 64>}, {transform_indices = @transform_4, window_bounds = array<i64: 1, 128, 128>}, {transform_indices = @transform_5, window_bounds = array<i64: 1, 128, 128>}, {transform_indices = @transform_6, window_bounds = array<i64: 1, 128, 128>}]} {
    %c0_i32 = arith.constant 0 : i32
    %0 = arith.cmpi eq, %arg2, %c0_i32 : i32
    %1 = arith.extui %0 : i1 to i32
    %c0_i32_0 = arith.constant 0 : i32
    %2 = arith.cmpi ne, %1, %c0_i32_0 : i32
    scf.if %2 {
      %cst_31 = arith.constant 0xFF800000 : f32
      %49 = vector.broadcast %cst_31 : f32 to vector<128x1xf32>
      %c0_32 = arith.constant 0 : index
      %c0_33 = arith.constant 0 : index
      %50 = vector.load %arg10[%c0_32, %c0_33] : memref<128x1xf32, #tpu.memory_space<vmem>>, vector<128x1xf32>
      tpu.vector_store %arg10[%c0_32, %c0_33], %49 {strides = array<i32>} : memref<128x1xf32, #tpu.memory_space<vmem>>, vector<128x1xf32>,
      %cst_34 = arith.constant 0.000000e+00 : f32
      %51 = vector.broadcast %cst_34 : f32 to vector<128x1xf32>
      %c0_35 = arith.constant 0 : index
      %c0_36 = arith.constant 0 : index
      %52 = vector.load %arg11[%c0_35, %c0_36] : memref<128x1xf32, #tpu.memory_space<vmem>>, vector<128x1xf32>
      tpu.vector_store %arg11[%c0_35, %c0_36], %51 {strides = array<i32>} : memref<128x1xf32, #tpu.memory_space<vmem>>, vector<128x1xf32>,
      %cst_37 = arith.constant 0.000000e+00 : f32
      %53 = vector.broadcast %cst_37 : f32 to vector<128x128xf32>
      %c0_38 = arith.constant 0 : index
      %c0_39 = arith.constant 0 : index
      %54 = vector.load %arg12[%c0_38, %c0_39] : memref<128x128xf32, #tpu.memory_space<vmem>>, vector<128x128xf32>
      tpu.vector_store %arg12[%c0_38, %c0_39], %53 {strides = array<i32>} : memref<128x128xf32, #tpu.memory_space<vmem>>, vector<128x128xf32>,
    } else {
    }
    %c0 = arith.constant 0 : index
    %3 = memref.load %arg3[%c0] : memref<2xf32, #tpu.memory_space<smem>>
    %c0_1 = arith.constant 0 : index
    %c0_2 = arith.constant 0 : index
    %c0_3 = arith.constant 0 : index
    %4 = vector.load %arg5[%c0_1, %c0_2, %c0_3] : memref<1x128x64xf32, #tpu.memory_space<vmem>>, vector<1x128x64xf32>
    %5 = vector.shape_cast %4 : vector<1x128x64xf32> to vector<128x64xf32>
    %6 = vector.broadcast %3 : f32 to vector<128x64xf32>
    %7 = arith.mulf %5, %6 : vector<128x64xf32>
    %8 = arith.truncf %7 : vector<128x64xf32> to vector<128x64xbf16>
    %c0_4 = arith.constant 0 : index
    %c0_5 = arith.constant 0 : index
    %c0_6 = arith.constant 0 : index
    %9 = vector.load %arg6[%c0_4, %c0_5, %c0_6] : memref<1x128x64xf32, #tpu.memory_space<vmem>>, vector<1x128x64xf32>
    %10 = vector.shape_cast %9 : vector<1x128x64xf32> to vector<128x64xf32>
    %11 = arith.truncf %10 : vector<128x64xf32> to vector<128x64xbf16>
    %cst = arith.constant dense<0.000000e+00> : vector<128x128xf32>
    %12 = tpu.matmul %8, %11, %cst {dimension_numbers = #tpu.dot_dimension_numbers<[1], [1], [0], [0], [0, 0, 1, 0], [], []>} : vector<128x64xbf16>, vector<128x64xbf16>, vector<128x128xf32> -> vector<128x128xf32>
    %c0_7 = arith.constant 0 : index
    %c0_8 = arith.constant 0 : index
    %13 = vector.load %arg10[%c0_7, %c0_8] : memref<128x1xf32, #tpu.memory_space<vmem>>, vector<128x1xf32>
    %cst_9 = arith.constant dense<0xFF800000> : vector<128xf32>
    %14 = vector.multi_reduction <maximumf>, %12, %cst_9 [1] : vector<128x128xf32> to vector<128xf32>
    %15 = vector.shape_cast %14 : vector<128xf32> to vector<128x1xf32>
    %16 = arith.maximumf %13, %15 : vector<128x1xf32>
    %17 = arith.subf %13, %16 : vector<128x1xf32>
    %18 = math.exp %17 : vector<128x1xf32>
    %19 = vector.broadcast %16 : vector<128x1xf32> to vector<128x128xf32>
    %20 = arith.subf %12, %19 : vector<128x128xf32>
    %21 = math.exp %20 : vector<128x128xf32>
    %c0_10 = arith.constant 0 : index
    %c0_11 = arith.constant 0 : index
    %22 = vector.load %arg11[%c0_10, %c0_11] : memref<128x1xf32, #tpu.memory_space<vmem>>, vector<128x1xf32>
    %23 = arith.mulf %18, %22 : vector<128x1xf32>
    %cst_12 = arith.constant dense<0.000000e+00> : vector<128xf32>
    %24 = vector.multi_reduction <add>, %21, %cst_12 [1] : vector<128x128xf32> to vector<128xf32>
    %25 = vector.shape_cast %24 : vector<128xf32> to vector<128x1xf32>
    %26 = arith.addf %23, %25 : vector<128x1xf32>
    %c0_13 = arith.constant 0 : index
    %c0_14 = arith.constant 0 : index
    %27 = vector.load %arg11[%c0_13, %c0_14] : memref<128x1xf32, #tpu.memory_space<vmem>>, vector<128x1xf32>
    tpu.vector_store %arg11[%c0_13, %c0_14], %26 {strides = array<i32>} : memref<128x1xf32, #tpu.memory_space<vmem>>, vector<128x1xf32>,
    %c0_15 = arith.constant 0 : index
    %c0_16 = arith.constant 0 : index
    %c0_17 = arith.constant 0 : index
    %28 = vector.load %arg8[%c0_15, %c0_16, %c0_17] : memref<1x128x128xi32, #tpu.memory_space<vmem>>, vector<1x128x128xi32>
    %29 = vector.shape_cast %28 : vector<1x128x128xi32> to vector<128x128xi32>
    %c0_18 = arith.constant 0 : index
    %30 = memref.load %arg4[%c0_18] : memref<1xi32, #tpu.memory_space<smem>>
    %31 = vector.broadcast %30 : i32 to vector<128x128xi32>
    %32 = arith.cmpi sge, %29, %31 : vector<128x128xi32>
    %cst_19 = arith.constant 0.000000e+00 : f32
    %33 = vector.broadcast %cst_19 : f32 to vector<128x128xf32>
    %34 = arith.select %32, %21, %33 : vector<128x128xi1>, vector<128x128xf32>
    %35 = arith.truncf %34 : vector<128x128xf32> to vector<128x128xbf16>
    %c0_20 = arith.constant 0 : index
    %c0_21 = arith.constant 0 : index
    %36 = vector.load %arg12[%c0_20, %c0_21] : memref<128x128xf32, #tpu.memory_space<vmem>>, vector<128x128xf32>
    %37 = vector.broadcast %18 : vector<128x1xf32> to vector<128x128xf32>
    %38 = arith.mulf %37, %36 : vector<128x128xf32>
    %c0_22 = arith.constant 0 : index
    %c0_23 = arith.constant 0 : index
    %c0_24 = arith.constant 0 : index
    %39 = vector.load %arg7[%c0_22, %c0_23, %c0_24] : memref<1x128x128xf32, #tpu.memory_space<vmem>>, vector<1x128x128xf32>
    %40 = vector.shape_cast %39 : vector<1x128x128xf32> to vector<128x128xf32>
    %41 = arith.truncf %40 : vector<128x128xf32> to vector<128x128xbf16>
    %cst_25 = arith.constant dense<0.000000e+00> : vector<128x128xf32>
    %42 = tpu.matmul %35, %41, %cst_25 {dimension_numbers = #tpu.dot_dimension_numbers<[1], [0], [0], [1], [0, 0, 1, 1], [], []>} : vector<128x128xbf16>, vector<128x128xbf16>, vector<128x128xf32> -> vector<128x128xf32>
    %43 = arith.addf %38, %42 : vector<128x128xf32>
    %c0_26 = arith.constant 0 : index
    %c0_27 = arith.constant 0 : index
    %44 = vector.load %arg12[%c0_26, %c0_27] : memref<128x128xf32, #tpu.memory_space<vmem>>, vector<128x128xf32>
    tpu.vector_store %arg12[%c0_26, %c0_27], %43 {strides = array<i32>} : memref<128x128xf32, #tpu.memory_space<vmem>>, vector<128x128xf32>,
    %c0_28 = arith.constant 0 : index
    %c0_29 = arith.constant 0 : index
    %45 = vector.load %arg10[%c0_28, %c0_29] : memref<128x1xf32, #tpu.memory_space<vmem>>, vector<128x1xf32>
    tpu.vector_store %arg10[%c0_28, %c0_29], %16 {strides = array<i32>} : memref<128x1xf32, #tpu.memory_space<vmem>>, vector<128x1xf32>,
    %c1_i32 = arith.constant 1 : i32
    %46 = arith.cmpi eq, %arg2, %c1_i32 : i32
    %47 = arith.extui %46 : i1 to i32
    %c0_i32_30 = arith.constant 0 : i32
    %48 = arith.cmpi ne, %47, %c0_i32_30 : i32
    scf.if %48 {
      %c1 = arith.constant 1 : index
      %49 = memref.load %arg3[%c1] : memref<2xf32, #tpu.memory_space<smem>>
      %c0_31 = arith.constant 0 : index
      %c0_32 = arith.constant 0 : index
      %50 = vector.load %arg11[%c0_31, %c0_32] : memref<128x1xf32, #tpu.memory_space<vmem>>, vector<128x1xf32>
      %51 = tpu.reciprocal %50 {approx = true} : vector<128x1xf32> -> vector<128x1xf32>
      %c0_33 = arith.constant 0 : index
      %c0_34 = arith.constant 0 : index
      %52 = vector.load %arg12[%c0_33, %c0_34] : memref<128x128xf32, #tpu.memory_space<vmem>>, vector<128x128xf32>
      %53 = vector.broadcast %49 : f32 to vector<128x1xf32>
      %54 = arith.mulf %51, %53 : vector<128x1xf32>
      %55 = vector.broadcast %54 : vector<128x1xf32> to vector<128x128xf32>
      %56 = arith.mulf %52, %55 : vector<128x128xf32>
      %c0_35 = arith.constant 0 : index
      %c0_36 = arith.constant 0 : index
      %c0_37 = arith.constant 0 : index
      %57 = vector.load %arg9[%c0_35, %c0_36, %c0_37] : memref<1x128x128xf32, #tpu.memory_space<vmem>>, vector<1x128x128xf32>
      %58 = vector.shape_cast %57 : vector<1x128x128xf32> to vector<128x128xf32>
      %59 = vector.shape_cast %56 : vector<128x128xf32> to vector<1x128x128xf32>
      tpu.vector_store %arg9[%c0_35, %c0_36, %c0_37], %59 {strides = array<i32>} : memref<1x128x128xf32, #tpu.memory_space<vmem>>, vector<1x128x128xf32>,
    } else {
    }
    return
  }
  func.func @transform_0(%arg0: i32, %arg1: i32, %arg2: i32) -> i32 {
    %c0_i32 = arith.constant 0 : i32
    %c0_i32_0 = arith.constant 0 : i32
    return %c0_i32 : i32
  }
  func.func @transform_1(%arg0: i32, %arg1: i32, %arg2: i32) -> i32 {
    %c0_i32 = arith.constant 0 : i32
    %c0_i32_0 = arith.constant 0 : i32
    return %c0_i32 : i32
  }
  func.func @transform_2(%arg0: i32, %arg1: i32, %arg2: i32) -> (i32, i32, i32) {
    %c0_i32 = arith.constant 0 : i32
    %c0_i32_0 = arith.constant 0 : i32
    return %arg0, %arg1, %c0_i32 : i32, i32, i32
  }
  func.func @transform_3(%arg0: i32, %arg1: i32, %arg2: i32) -> (i32, i32, i32) {
    %c0_i32 = arith.constant 0 : i32
    %c0_i32_0 = arith.constant 0 : i32
    return %arg0, %arg2, %c0_i32 : i32, i32, i32
  }
  func.func @transform_4(%arg0: i32, %arg1: i32, %arg2: i32) -> (i32, i32, i32) {
    %c0_i32 = arith.constant 0 : i32
    %c0_i32_0 = arith.constant 0 : i32
    return %arg0, %arg2, %c0_i32 : i32, i32, i32
  }
  func.func @transform_5(%arg0: i32, %arg1: i32, %arg2: i32) -> (i32, i32, i32) {
    %c0_i32 = arith.constant 0 : i32
    return %arg0, %arg1, %arg2 : i32, i32, i32
  }
  func.func @transform_6(%arg0: i32, %arg1: i32, %arg2: i32) -> (i32, i32, i32) {
    %c0_i32 = arith.constant 0 : i32
    %c0_i32_0 = arith.constant 0 : i32
    return %arg0, %arg1, %c0_i32 : i32, i32, i32
  }
}

</mosaic_0001>

<llo_original>
// kernel: sdpa_dropout.1
$region0: #{sdpa_dropout.1}
  #allocation0 [shape = 'u32[]', space=smem, size = 0x4, offset = 0x4, fixed_abs, tag = 'smem constant byte address 0x4 - core index']
  #allocation1 [shape = 'u32[144,128]{1,0:T(1,128)}', space=vmem, size = 0x12000, scoped, tag = 'internal scratch']
  #allocation2 [shape = 'f32[128,1]{1,0:T(8,128)}', space=vmem, size = 0x10000, scoped, tag = 'scratch operand']
  #allocation3 [shape = 'f32[128,1]{1,0:T(8,128)}', space=vmem, size = 0x10000, scoped, tag = 'scratch operand']
  #allocation4 [shape = 'f32[128,128]{1,0:T(8,128)}', space=vmem, size = 0x10000, scoped, tag = 'scratch operand']
  #allocation5 [shape = 's32[1]{0:T(128)S(6)}', space=smem, size = 0x200, scoped, tag = 'scoped memory for sdpa_dropout.1']
  %s0 = inlined_call_operand.hbm [shape: f32[2], index: 0, kind: input, shape index: {}]
  %s1 = inlined_call_operand.<no memory space> [shape: s32[1], index: 1, kind: input, shape index: {}]
  %s2 = inlined_call_operand.hbm [shape: f32[2,128,64], index: 2, kind: input, shape index: {}]
  %s3 = inlined_call_operand.hbm [shape: f32[2,256,64], index: 3, kind: input, shape index: {}]
  %s4 = inlined_call_operand.hbm [shape: f32[2,256,128], index: 4, kind: input, shape index: {}]
  %s5 = inlined_call_operand.hbm [shape: s32[2,128,256], index: 5, kind: input, shape index: {}]
  %s6 = inlined_call_operand.hbm [shape: f32[2,128,128], index: 6, kind: output, shape index: {}]
  %s7 = sld [smem:[#allocation0]]
  $region85: #{sdpa_dropout.1} parent=0
    _
  %s9 = ssub.s32 1, %s7
  %s10 = scalar_select 0, %s9, %s7
  %11 = sst [smem:[#allocation5]] %s1
  $region1: #{sdpa_dropout.1} parent=0
    #allocation6 [shape = 'u8[512]{0}', space=smem, size = 0x200, scoped, tag = 'input window, operand 0, single buffered']
    #allocation7 [shape = 's32[2]{0}', space=sflag, size = 0x8, scoped, tag = 'scoped memory for sdpa_dropout.1']
    #allocation8 [shape = 's32[2]{0}', space=sflag, size = 0x8, scoped, tag = 'scoped memory for sdpa_dropout.1']
    #allocation9 [shape = 's32[2]{0}', space=sflag, size = 0x8, scoped, tag = 'scoped memory for sdpa_dropout.1']
    #allocation10 [shape = 'u8[131072]{0}', space=vmem, size = 0x20000, scoped, tag = 'input window, operand 2']
    #allocation11 [shape = 'u8[131072]{0}', space=vmem, size = 0x20000, scoped, tag = 'input window, operand 3']
    #allocation12 [shape = 's32[2]{0}', space=sflag, size = 0x8, scoped, tag = 'scoped memory for sdpa_dropout.1']
    #allocation13 [shape = 'u8[131072]{0}', space=vmem, size = 0x20000, scoped, tag = 'input window, operand 4']
    #allocation14 [shape = 'u8[131072]{0}', space=vmem, size = 0x20000, scoped, tag = 'input window, operand 5']
    #allocation15 [shape = 's32[2]{0}', space=sflag, size = 0x8, scoped, tag = 'scoped memory for sdpa_dropout.1']
    #allocation16 [shape = 'u8[131072]{0}', space=vmem, size = 0x20000, scoped, tag = 'output window, operand 0']
    %12 = vsyncpa [#allocation9], 0
    %13 = vsyncpa [#allocation7], 0
    %s14 = scalar_lea.sflag [#allocation7], 1
    %15 = vsyncpa %s14, 0
    %16 = vsyncpa [#allocation12], 0
    %s17 = scalar_lea.sflag [#allocation12], 1
    %18 = vsyncpa %s17, 0
    %19 = vsyncpa [#allocation15], 0
    %s20 = scalar_lea.sflag [#allocation15], 1
    %21 = vsyncpa %s20, 0
    %22 = vsyncpa [#allocation8], 0
    %s23 = scalar_lea.sflag [#allocation8], 1
    %24 = vsyncpa %s23, 0
    loop: start=0, step=1, limit=6
    $region2: #{sdpa_dropout.1} parent=1 // loop_pre_header
      _
    $region3: #{sdpa_dropout.1} parent=1 // loop_header
      %s26 = sphi 0, %s30
      %p27 = scmp.ge.s32.totalorder %s26, 6
      %s33 = sphi 0, %s52
      %s34 = sphi 0, %s48
      %s35 = sphi 0, %s44
      %s36 = sphi 0, %s33
      %s37 = sphi 0, %s34
      %s38 = sphi 0, %s35
      %s39 = sphi 0, %s36
      %s40 = sphi 0, %s37
      %s41 = sphi 0, %s38
      %s53 = sphi 0, %s53
      %s55 = sphi 0, %s53
      %s56 = sphi 0, %s55
      %s70 = sphi 0, %s56
      %s74 = sphi 0, %s74
      %s76 = sphi 0, %s74
      %s77 = sphi 0, %s76
      %s91 = sphi 0, %s77
      %s99 = sphi 0, %s101
      %s102 = sphi 0, %s99
      %s103 = sphi 0, %s102
      %s119 = sphi 0, %s103
      %s127 = sphi 0, %s129
      %s130 = sphi 0, %s127
      %s131 = sphi 0, %s130
      %s147 = sphi 0, %s131
      %s155 = sphi 0, %s157
      %s158 = sphi 0, %s155
      %s159 = sphi 0, %s158
      %s175 = sphi 0, %s159
      %s185 = sphi 0, %s187
      %s188 = sphi 0, %s185
      %s189 = sphi 0, %s188
      %s205 = sphi 0, %s189
      %s213 = sphi 0, %s215
      %s216 = sphi 0, %s213
      %s217 = sphi 0, %s216
      %s233 = sphi 0, %s217
    $region4: #{sdpa_dropout.1} parent=1 // loop_header_branch
      %29 = sbr.rel (%p27) target = $region8
    $region5: #{sdpa_dropout.1} parent=1 // loop_body
      %s31 = ssub.s32 %s26, 1
      %s32 = ssub.s32 %s26, 2
      %s42 = sadd.s32 1, %s35
      %p43 = scmp.ge.s32.totalorder %s42, 2
      %s44 = scalar_select %p43, 0, %s42
      %s45 = sadd.s32 1, %s34
      %s46 = scalar_select %p43, %s45, %s34
      %p47 = scmp.ge.s32.totalorder %s46, 1
      %s48 = scalar_select %p47, 0, %s46
      %s49 = sadd.s32 1, %s33
      %s50 = scalar_select %p47, %s49, %s33
      %p51 = scmp.ge.s32.totalorder %s50, 2
      %s52 = scalar_select %p51, 0, %s50
      %s54 = sadd.s32 %s53, 1
      %p57 = scmp.eq.s32.totalorder %s26, 3
      %p58 = scmp.ne.s32.totalorder %s53, %s55
      %p59 = scmp.eq.s32.totalorder %s26, 0
      %p60 = por %p58, %p59
      %p61 = scmp.ne.s32.totalorder %s53, %s55
      %p62 = scmp.eq.s32.totalorder %s31, 3
      %p63 = por %p61, %p62
      %p64 = scmp.ne.s32.totalorder %s55, %s56
      %p65 = scmp.eq.s32.totalorder %s31, 0
      %p66 = por %p64, %p65
      %p67 = scmp.ne.s32.totalorder %s55, %s56
      %p68 = scmp.eq.s32.totalorder %s32, 3
      %p69 = por %p67, %p68
      %p71 = scmp.ne.s32.totalorder %s56, %s70
      %p72 = scmp.eq.s32.totalorder %s32, 0
      %p73 = por %p71, %p72
      %s75 = sadd.s32 %s74, 1
      %p78 = scmp.eq.s32.totalorder %s26, 3
      %p79 = scmp.ne.s32.totalorder %s74, %s76
      %p80 = scmp.eq.s32.totalorder %s26, 0
      %p81 = por %p79, %p80
      %p82 = scmp.ne.s32.totalorder %s74, %s76
      %p83 = scmp.eq.s32.totalorder %s31, 3
      %p84 = por %p82, %p83
      %p85 = scmp.ne.s32.totalorder %s76, %s77
      %p86 = scmp.eq.s32.totalorder %s31, 0
      %p87 = por %p85, %p86
      %p88 = scmp.ne.s32.totalorder %s76, %s77
      %p89 = scmp.eq.s32.totalorder %s32, 3
      %p90 = por %p88, %p89
      %p92 = scmp.ne.s32.totalorder %s77, %s91
      %p93 = scmp.eq.s32.totalorder %s32, 0
      %p94 = por %p92, %p93
      %s95 = ssub.s32 %s33, %s52
      %s96 = ssub.s32 %s34, %s48
      %s97 = sor.u32 %s95, %s96
      %p98 = scmp.eq.s32.totalorder %s97, 0
      %s100 = sadd.s32 %s99, 1
      %s101 = scalar_select %p98, %s99, %s100
      %p104 = pneg %p98
      %p105 = scmp.eq.s32.totalorder %s26, 3
      %p106 = por %p104, %p105
      %p107 = scmp.ne.s32.totalorder %s99, %s102
      %p108 = scmp.eq.s32.totalorder %s26, 0
      %p109 = por %p107, %p108
      %p110 = scmp.ne.s32.totalorder %s99, %s102
      %p111 = scmp.eq.s32.totalorder %s31, 3
      %p112 = por %p110, %p111
      %p113 = scmp.ne.s32.totalorder %s102, %s103
      %p114 = scmp.eq.s32.totalorder %s31, 0
      %p115 = por %p113, %p114
      %p116 = scmp.ne.s32.totalorder %s102, %s103
      %p117 = scmp.eq.s32.totalorder %s32, 3
      %p118 = por %p116, %p117
      %p120 = scmp.ne.s32.totalorder %s103, %s119
      %p121 = scmp.eq.s32.totalorder %s32, 0
      %p122 = por %p120, %p121
      %s123 = ssub.s32 %s33, %s52
      %s124 = ssub.s32 %s35, %s44
      %s125 = sor.u32 %s123, %s124
      %p126 = scmp.eq.s32.totalorder %s125, 0
      %s128 = sadd.s32 %s127, 1
      %s129 = scalar_select %p126, %s127, %s128
      %p132 = pneg %p126
      %p133 = scmp.eq.s32.totalorder %s26, 3
      %p134 = por %p132, %p133
      %p135 = scmp.ne.s32.totalorder %s127, %s130
      %p136 = scmp.eq.s32.totalorder %s26, 0
      %p137 = por %p135, %p136
      %p138 = scmp.ne.s32.totalorder %s127, %s130
      %p139 = scmp.eq.s32.totalorder %s31, 3
      %p140 = por %p138, %p139
      %p141 = scmp.ne.s32.totalorder %s130, %s131
      %p142 = scmp.eq.s32.totalorder %s31, 0
      %p143 = por %p141, %p142
      %p144 = scmp.ne.s32.totalorder %s130, %s131
      %p145 = scmp.eq.s32.totalorder %s32, 3
      %p146 = por %p144, %p145
      %p148 = scmp.ne.s32.totalorder %s131, %s147
      %p149 = scmp.eq.s32.totalorder %s32, 0
      %p150 = por %p148, %p149
      %s151 = ssub.s32 %s33, %s52
      %s152 = ssub.s32 %s35, %s44
      %s153 = sor.u32 %s151, %s152
      %p154 = scmp.eq.s32.totalorder %s153, 0
      %s156 = sadd.s32 %s155, 1
      %s157 = scalar_select %p154, %s155, %s156
      %p160 = pneg %p154
      %p161 = scmp.eq.s32.totalorder %s26, 3
      %p162 = por %p160, %p161
      %p163 = scmp.ne.s32.totalorder %s155, %s158
      %p164 = scmp.eq.s32.totalorder %s26, 0
      %p165 = por %p163, %p164
      %p166 = scmp.ne.s32.totalorder %s155, %s158
      %p167 = scmp.eq.s32.totalorder %s31, 3
      %p168 = por %p166, %p167
      %p169 = scmp.ne.s32.totalorder %s158, %s159
      %p170 = scmp.eq.s32.totalorder %s31, 0
      %p171 = por %p169, %p170
      %p172 = scmp.ne.s32.totalorder %s158, %s159
      %p173 = scmp.eq.s32.totalorder %s32, 3
      %p174 = por %p172, %p173
      %p176 = scmp.ne.s32.totalorder %s159, %s175
      %p177 = scmp.eq.s32.totalorder %s32, 0
      %p178 = por %p176, %p177
      %s179 = ssub.s32 %s33, %s52
      %s180 = ssub.s32 %s34, %s48
      %s181 = sor.u32 %s179, %s180
      %s182 = ssub.s32 %s35, %s44
      %s183 = sor.u32 %s181, %s182
      %p184 = scmp.eq.s32.totalorder %s183, 0
      %s186 = sadd.s32 %s185, 1
      %s187 = scalar_select %p184, %s185, %s186
      %p190 = pneg %p184
      %p191 = scmp.eq.s32.totalorder %s26, 3
      %p192 = por %p190, %p191
      %p193 = scmp.ne.s32.totalorder %s185, %s188
      %p194 = scmp.eq.s32.totalorder %s26, 0
      %p195 = por %p193, %p194
      %p196 = scmp.ne.s32.totalorder %s185, %s188
      %p197 = scmp.eq.s32.totalorder %s31, 3
      %p198 = por %p196, %p197
      %p199 = scmp.ne.s32.totalorder %s188, %s189
      %p200 = scmp.eq.s32.totalorder %s31, 0
      %p201 = por %p199, %p200
      %p202 = scmp.ne.s32.totalorder %s188, %s189
      %p203 = scmp.eq.s32.totalorder %s32, 3
      %p204 = por %p202, %p203
      %p206 = scmp.ne.s32.totalorder %s189, %s205
      %p207 = scmp.eq.s32.totalorder %s32, 0
      %p208 = por %p206, %p207
      %s209 = ssub.s32 %s33, %s52
      %s210 = ssub.s32 %s34, %s48
      %s211 = sor.u32 %s209, %s210
      %p212 = scmp.eq.s32.totalorder %s211, 0
      %s214 = sadd.s32 %s213, 1
      %s215 = scalar_select %p212, %s213, %s214
      %p218 = pneg %p212
      %p219 = scmp.eq.s32.totalorder %s26, 3
      %p220 = por %p218, %p219
      %p221 = scmp.ne.s32.totalorder %s213, %s216
      %p222 = scmp.eq.s32.totalorder %s26, 0
      %p223 = por %p221, %p222
      %p224 = scmp.ne.s32.totalorder %s213, %s216
      %p225 = scmp.eq.s32.totalorder %s31, 3
      %p226 = por %p224, %p225
      %p227 = scmp.ne.s32.totalorder %s216, %s217
      %p228 = scmp.eq.s32.totalorder %s31, 0
      %p229 = por %p227, %p228
      %p230 = scmp.ne.s32.totalorder %s216, %s217
      %p231 = scmp.eq.s32.totalorder %s32, 3
      %p232 = por %p230, %p231
      %p234 = scmp.ne.s32.totalorder %s217, %s233
      %p235 = scmp.eq.s32.totalorder %s32, 0
      %p236 = por %p234, %p235
      %p237 = scmp.le.s32.totalorder 1, %s26
      %p238 = scmp.lt.s32.totalorder %s26, 5
      %p239 = pnand %p237, %p238
      %p240 = pneg %p239
      // Predicated region
      $region9: #{sdpa_dropout.1} parent=5 // pred_check
        _
      $region10: #{sdpa_dropout.1} parent=5 // pred_check_branch
        %242 = sbr.rel (%p239) target = $region12
      $region11: #{sdpa_dropout.1} parent=5 // pred_region
        %s243 = ssub.s32 %s26, 1
        // Predicated region
        $region13: #{sdpa_dropout.1} parent=11 // pred_check
          %p244 = pneg %p66
        $region14: #{sdpa_dropout.1} parent=11 // pred_check_branch
          %246 = sbr.rel (%p244) target = $region16
        $region15: #{sdpa_dropout.1} parent=11 // pred_region
          %s248 = ssub.s32 16, 16
          %249 = vsyncadd [#allocation9], %s248
          %252 = dma.hbm_to_smem %s0, 16, [#allocation6], [#allocation9]
        $region16: #{sdpa_dropout.1} parent=11 // pred_fallthru
          _
        // Predicated region
        $region17: #{sdpa_dropout.1} parent=11 // pred_check
          %p253 = pneg %p87
        $region18: #{sdpa_dropout.1} parent=11 // pred_check_branch
          %255 = sbr.rel (%p253) target = $region20
        $region19: #{sdpa_dropout.1} parent=11 // pred_region
          _
        $region20: #{sdpa_dropout.1} parent=11 // pred_fallthru
          _
      $region12: #{sdpa_dropout.1} parent=5 // pred_fallthru
        _
      %p256 = scmp.lt.s32.totalorder %s26, 4
      // Predicated region
      $region21: #{sdpa_dropout.1} parent=5 // pred_check
        %p257 = pneg %p256
      $region22: #{sdpa_dropout.1} parent=5 // pred_check_branch
        %259 = sbr.rel (%p257) target = $region24
      $region23: #{sdpa_dropout.1} parent=5 // pred_region
        // Predicated region
        $region25: #{sdpa_dropout.1} parent=23 // pred_check
          %p260 = pneg %p109
        $region26: #{sdpa_dropout.1} parent=23 // pred_check_branch
          %262 = sbr.rel (%p260) target = $region28
        $region27: #{sdpa_dropout.1} parent=23 // pred_region
          %s263 = sand.u32 %s99, 1
          %s264 = scalar_lea.sflag [#allocation7], %s263
          %s265 = sand.u32 %s99, 1
          %s266 = smul.addr %s265, 128
          %s267 = scalar_lea.vmem [#allocation10], %s266
          %s268 = smul.u32 16, %s34
          %s270 = ssub.s32 2048, 2048
          %271 = vsyncadd %s264, %s270
          %s272 = smul.addr %s33, 16
          %s273 = sadd.s32 %s268, %s272
          %s274 = smul.addr %s273, 128
          %s275 = scalar_lea.hbm %s2, %s274
          %s276 = sshll.u32 %s267, 4
          %s277 = int_to_ptr.vmem [resolvable:$true] %s276
          %282 = dma.hbm_to_vmem [thread:$0]  %s275, 2048, %s277, %s264, 128, 128, 8
        $region28: #{sdpa_dropout.1} parent=23 // pred_fallthru
          _
        // Predicated region
        $region29: #{sdpa_dropout.1} parent=23 // pred_check
          %p283 = pneg %p137
        $region30: #{sdpa_dropout.1} parent=23 // pred_check_branch
          %285 = sbr.rel (%p283) target = $region32
        $region31: #{sdpa_dropout.1} parent=23 // pred_region
          %s286 = sand.u32 %s26, 1
          %s287 = scalar_lea.sflag [#allocation12], %s286
          %s288 = sand.u32 %s127, 1
          %s289 = smul.addr %s288, 128
          %s290 = scalar_lea.vmem [#allocation11], %s289
          %s291 = smul.u32 16, %s35
          %s293 = ssub.s32 2048, 2048
          %294 = vsyncadd %s287, %s293
          %s295 = smul.addr %s33, 32
          %s296 = sadd.s32 %s291, %s295
          %s297 = smul.addr %s296, 128
          %s298 = scalar_lea.hbm %s3, %s297
          %s299 = sshll.u32 %s290, 4
          %s300 = int_to_ptr.vmem [resolvable:$true] %s299
          %305 = dma.hbm_to_vmem [thread:$0]  %s298, 2048, %s300, %s287, 128, 128, 8
        $region32: #{sdpa_dropout.1} parent=23 // pred_fallthru
          _
        // Predicated region
        $region33: #{sdpa_dropout.1} parent=23 // pred_check
          %p306 = pneg %p165
        $region34: #{sdpa_dropout.1} parent=23 // pred_check_branch
          %308 = sbr.rel (%p306) target = $region36
        $region35: #{sdpa_dropout.1} parent=23 // pred_region
          %s309 = sand.u32 %s26, 1
          %s310 = scalar_lea.sflag [#allocation12], %s309
          %s311 = sand.u32 %s155, 1
          %s312 = smul.addr %s311, 128
          %s313 = scalar_lea.vmem [#allocation13], %s312
          %s314 = smul.u32 16, %s35
          %s316 = ssub.s32 2048, 2048
          %317 = vsyncadd %s310, %s316
          %s318 = smul.addr %s33, 32
          %s319 = sadd.s32 %s314, %s318
          %s320 = smul.addr %s319, 128
          %s321 = scalar_lea.hbm %s4, %s320
          %s322 = sshll.u32 %s313, 4
          %s323 = int_to_ptr.vmem [resolvable:$true] %s322
          %328 = dma.hbm_to_vmem [thread:$0]  %s321, 2048, %s323, %s310, 128, 128, 8
        $region36: #{sdpa_dropout.1} parent=23 // pred_fallthru
          _
        // Predicated region
        $region37: #{sdpa_dropout.1} parent=23 // pred_check
          %p329 = pneg %p195
        $region38: #{sdpa_dropout.1} parent=23 // pred_check_branch
          %331 = sbr.rel (%p329) target = $region40
        $region39: #{sdpa_dropout.1} parent=23 // pred_region
          %s332 = sand.u32 %s185, 1
          %s333 = scalar_lea.sflag [#allocation15], %s332
          %s334 = sand.u32 %s185, 1
          %s335 = smul.addr %s334, 128
          %s336 = scalar_lea.vmem [#allocation14], %s335
          %s337 = smul.u32 16, %s34
          %s339 = ssub.s32 2048, 2048
          %340 = vsyncadd %s333, %s339
          %s341 = smul.addr %s337, 2
          %s342 = sadd.s32 %s35, %s341
          %s343 = smul.addr %s33, 32
          %s344 = sadd.s32 %s342, %s343
          %s345 = smul.addr %s344, 128
          %s346 = scalar_lea.hbm %s5, %s345
          %s347 = sshll.u32 %s336, 4
          %s348 = int_to_ptr.vmem [resolvable:$true] %s347
          %353 = dma.hbm_to_vmem [thread:$0]  %s346, 2048, %s348, %s333, 256, 128, 8
        $region40: #{sdpa_dropout.1} parent=23 // pred_fallthru
          _
      $region24: #{sdpa_dropout.1} parent=5 // pred_fallthru
        _
      %p354 = scmp.le.s32.totalorder 1, %s26
      %p355 = scmp.lt.s32.totalorder %s26, 5
      %p356 = pnand %p354, %p355
      %p357 = pneg %p356
      // Predicated region
      $region41: #{sdpa_dropout.1} parent=5 // pred_check
        _
      $region42: #{sdpa_dropout.1} parent=5 // pred_check_branch
        %359 = sbr.rel (%p356) target = $region44
      $region43: #{sdpa_dropout.1} parent=5 // pred_region
        %s360 = ssub.s32 %s26, 1
        // Predicated region
        $region45: #{sdpa_dropout.1} parent=43 // pred_check
          %p361 = pneg %p66
        $region46: #{sdpa_dropout.1} parent=43 // pred_check_branch
          %363 = sbr.rel (%p361) target = $region48
        $region47: #{sdpa_dropout.1} parent=43 // pred_region
          %364 = dma.done [#allocation9], 16
        $region48: #{sdpa_dropout.1} parent=43 // pred_fallthru
          _
        %s365 = sand.u32 %s102, 1
        %s366 = scalar_lea.sflag [#allocation7], %s365
        %s367 = sand.u32 %s102, 1
        %s368 = smul.addr %s367, 128
        %s369 = scalar_lea.vmem [#allocation10], %s368
        // Predicated region
        $region49: #{sdpa_dropout.1} parent=43 // pred_check
          %p370 = pneg %p115
        $region50: #{sdpa_dropout.1} parent=43 // pred_check_branch
          %372 = sbr.rel (%p370) target = $region52
        $region51: #{sdpa_dropout.1} parent=43 // pred_region
          %373 = dma.done %s366, 2048
        $region52: #{sdpa_dropout.1} parent=43 // pred_fallthru
          _
        %s374 = sand.u32 %s31, 1
        %s375 = scalar_lea.sflag [#allocation12], %s374
        %s376 = sand.u32 %s130, 1
        %s377 = smul.addr %s376, 128
        %s378 = scalar_lea.vmem [#allocation11], %s377
        // Predicated region
        $region53: #{sdpa_dropout.1} parent=43 // pred_check
          %p379 = pneg %p143
        $region54: #{sdpa_dropout.1} parent=43 // pred_check_branch
          %381 = sbr.rel (%p379) target = $region56
        $region55: #{sdpa_dropout.1} parent=43 // pred_region
          %382 = dma.done %s375, 2048
        $region56: #{sdpa_dropout.1} parent=43 // pred_fallthru
          _
        %s383 = sand.u32 %s31, 1
        %s384 = scalar_lea.sflag [#allocation12], %s383
        %s385 = sand.u32 %s158, 1
        %s386 = smul.addr %s385, 128
        %s387 = scalar_lea.vmem [#allocation13], %s386
        // Predicated region
        $region57: #{sdpa_dropout.1} parent=43 // pred_check
          %p388 = pneg %p171
        $region58: #{sdpa_dropout.1} parent=43 // pred_check_branch
          %390 = sbr.rel (%p388) target = $region60
        $region59: #{sdpa_dropout.1} parent=43 // pred_region
          %391 = dma.done %s384, 2048
        $region60: #{sdpa_dropout.1} parent=43 // pred_fallthru
          _
        %s392 = sand.u32 %s188, 1
        %s393 = scalar_lea.sflag [#allocation15], %s392
        %s394 = sand.u32 %s188, 1
        %s395 = smul.addr %s394, 128
        %s396 = scalar_lea.vmem [#allocation14], %s395
        // Predicated region
        $region61: #{sdpa_dropout.1} parent=43 // pred_check
          %p397 = pneg %p201
        $region62: #{sdpa_dropout.1} parent=43 // pred_check_branch
          %399 = sbr.rel (%p397) target = $region64
        $region63: #{sdpa_dropout.1} parent=43 // pred_region
          %400 = dma.done %s393, 2048
        $region64: #{sdpa_dropout.1} parent=43 // pred_fallthru
          _
        %401 = sfence
        %p402 = pneg %p66
        %p403 = pneg %p63
        %p404 = pneg %p87
        %p405 = pneg %p84
        %s406 = sand.u32 %s102, 1
        %s407 = scalar_lea.sflag [#allocation7], %s406
        %s408 = sand.u32 %s102, 1
        %s409 = smul.addr %s408, 128
        %s410 = scalar_lea.vmem [#allocation10], %s409
        %p411 = pneg %p115
        %p412 = pneg %p112
        %s413 = sand.u32 %s31, 1
        %s414 = scalar_lea.sflag [#allocation12], %s413
        %s415 = sand.u32 %s130, 1
        %s416 = smul.addr %s415, 128
        %s417 = scalar_lea.vmem [#allocation11], %s416
        %p418 = pneg %p143
        %p419 = pneg %p140
        %s420 = sand.u32 %s31, 1
        %s421 = scalar_lea.sflag [#allocation12], %s420
        %s422 = sand.u32 %s158, 1
        %s423 = smul.addr %s422, 128
        %s424 = scalar_lea.vmem [#allocation13], %s423
        %p425 = pneg %p171
        %p426 = pneg %p168
        %s427 = sand.u32 %s188, 1
        %s428 = scalar_lea.sflag [#allocation15], %s427
        %s429 = sand.u32 %s188, 1
        %s430 = smul.addr %s429, 128
        %s431 = scalar_lea.vmem [#allocation14], %s430
        %p432 = pneg %p201
        %p433 = pneg %p198
        %p434 = pneg %p229
        %p435 = pneg %p226
        %s436 = sand.u32 %s216, 1
        %s437 = scalar_lea.sflag [#allocation8], %s436
        %s438 = sand.u32 %s216, 1
        %s439 = smul.addr %s438, 128
        %s440 = scalar_lea.vmem [#allocation16], %s439
        %s441 = smul.u32 16, %s37
        %s442 = smul.u32 16, %s38
        %s443 = smul.u32 16, %s38
        %s444 = smul.u32 16, %s37
        %s445 = smul.u32 16, %s37
        %p447 = scmp.eq.s32.totalorder %s38, 0
        // Predicated region
        $region65: #{sdpa_dropout.1} parent=43 // pred_check
          %p448 = pneg %p447
        $region66: #{sdpa_dropout.1} parent=43 // pred_check_branch
          %450 = sbr.rel (%p448) target = $region68
        $region67: #{sdpa_dropout.1} parent=43 // pred_region
          %vm451 = vcmask 7168
          %452 = vst.msk [vmem:[#allocation2] sm:$0xff] %vm451, -inf
          %453 = vst.msk [vmem:[#allocation2 + $0x8] sm:$0xff] %vm451, -inf
          %454 = vst.msk [vmem:[#allocation2 + $0x10] sm:$0xff] %vm451, -inf
          %455 = vst.msk [vmem:[#allocation2 + $0x18] sm:$0xff] %vm451, -inf
          %456 = vst.msk [vmem:[#allocation2 + $0x20] sm:$0xff] %vm451, -inf
          %457 = vst.msk [vmem:[#allocation2 + $0x28] sm:$0xff] %vm451, -inf
          %458 = vst.msk [vmem:[#allocation2 + $0x30] sm:$0xff] %vm451, -inf
          %459 = vst.msk [vmem:[#allocation2 + $0x38] sm:$0xff] %vm451, -inf
          %460 = vst.msk [vmem:[#allocation2 + $0x40] sm:$0xff] %vm451, -inf
          %461 = vst.msk [vmem:[#allocation2 + $0x48] sm:$0xff] %vm451, -inf
          %462 = vst.msk [vmem:[#allocation2 + $0x50] sm:$0xff] %vm451, -inf
          %463 = vst.msk [vmem:[#allocation2 + $0x58] sm:$0xff] %vm451, -inf
          %464 = vst.msk [vmem:[#allocation2 + $0x60] sm:$0xff] %vm451, -inf
          %465 = vst.msk [vmem:[#allocation2 + $0x68] sm:$0xff] %vm451, -inf
          %466 = vst.msk [vmem:[#allocation2 + $0x70] sm:$0xff] %vm451, -inf
          %467 = vst.msk [vmem:[#allocation2 + $0x78] sm:$0xff] %vm451, -inf
          %468 = vst.msk [vmem:[#allocation3] sm:$0xff] %vm451, 0.0
          %469 = vst.msk [vmem:[#allocation3 + $0x8] sm:$0xff] %vm451, 0.0
          %470 = vst.msk [vmem:[#allocation3 + $0x10] sm:$0xff] %vm451, 0.0
          %471 = vst.msk [vmem:[#allocation3 + $0x18] sm:$0xff] %vm451, 0.0
          %472 = vst.msk [vmem:[#allocation3 + $0x20] sm:$0xff] %vm451, 0.0
          %473 = vst.msk [vmem:[#allocation3 + $0x28] sm:$0xff] %vm451, 0.0
          %474 = vst.msk [vmem:[#allocation3 + $0x30] sm:$0xff] %vm451, 0.0
          %475 = vst.msk [vmem:[#allocation3 + $0x38] sm:$0xff] %vm451, 0.0
          %476 = vst.msk [vmem:[#allocation3 + $0x40] sm:$0xff] %vm451, 0.0
          %477 = vst.msk [vmem:[#allocation3 + $0x48] sm:$0xff] %vm451, 0.0
          %478 = vst.msk [vmem:[#allocation3 + $0x50] sm:$0xff] %vm451, 0.0
          %479 = vst.msk [vmem:[#allocation3 + $0x58] sm:$0xff] %vm451, 0.0
          %480 = vst.msk [vmem:[#allocation3 + $0x60] sm:$0xff] %vm451, 0.0
          %481 = vst.msk [vmem:[#allocation3 + $0x68] sm:$0xff] %vm451, 0.0
          %482 = vst.msk [vmem:[#allocation3 + $0x70] sm:$0xff] %vm451, 0.0
          %483 = vst.msk [vmem:[#allocation3 + $0x78] sm:$0xff] %vm451, 0.0
          %484 = vst [vmem:[#allocation4] sm:$0xff] 0.0
          %485 = vst [vmem:[#allocation4 + $0x8] sm:$0xff] 0.0
          %486 = vst [vmem:[#allocation4 + $0x10] sm:$0xff] 0.0
          %487 = vst [vmem:[#allocation4 + $0x18] sm:$0xff] 0.0
          %488 = vst [vmem:[#allocation4 + $0x20] sm:$0xff] 0.0
          %489 = vst [vmem:[#allocation4 + $0x28] sm:$0xff] 0.0
          %490 = vst [vmem:[#allocation4 + $0x30] sm:$0xff] 0.0
          %491 = vst [vmem:[#allocation4 + $0x38] sm:$0xff] 0.0
          %492 = vst [vmem:[#allocation4 + $0x40] sm:$0xff] 0.0
          %493 = vst [vmem:[#allocation4 + $0x48] sm:$0xff] 0.0
          %494 = vst [vmem:[#allocation4 + $0x50] sm:$0xff] 0.0
          %495 = vst [vmem:[#allocation4 + $0x58] sm:$0xff] 0.0
          %496 = vst [vmem:[#allocation4 + $0x60] sm:$0xff] 0.0
          %497 = vst [vmem:[#allocation4 + $0x68] sm:$0xff] 0.0
          %498 = vst [vmem:[#allocation4 + $0x70] sm:$0xff] 0.0
          %499 = vst [vmem:[#allocation4 + $0x78] sm:$0xff] 0.0
        $region68: #{sdpa_dropout.1} parent=43 // pred_fallthru
          _
        %s500 = sld [smem:[#allocation6]]
        %v501 = vld [vmem:[%s369] sm:$0xff]
        %v502 = vld [vmem:[%s369 + $0x8] sm:$0xff]
        %v503 = vld [vmem:[%s369 + $0x10] sm:$0xff]
        %v504 = vld [vmem:[%s369 + $0x18] sm:$0xff]
        %v505 = vld [vmem:[%s369 + $0x20] sm:$0xff]
        %v506 = vld [vmem:[%s369 + $0x28] sm:$0xff]
        %v507 = vld [vmem:[%s369 + $0x30] sm:$0xff]
        %v508 = vld [vmem:[%s369 + $0x38] sm:$0xff]
        %v509 = vld [vmem:[%s369 + $0x40] sm:$0xff]
        %v510 = vld [vmem:[%s369 + $0x48] sm:$0xff]
        %v511 = vld [vmem:[%s369 + $0x50] sm:$0xff]
        %v512 = vld [vmem:[%s369 + $0x58] sm:$0xff]
        %v513 = vld [vmem:[%s369 + $0x60] sm:$0xff]
        %v514 = vld [vmem:[%s369 + $0x68] sm:$0xff]
        %v515 = vld [vmem:[%s369 + $0x70] sm:$0xff]
        %v516 = vld [vmem:[%s369 + $0x78] sm:$0xff]
        %v517 = vstv %s500
        %v518 = vmul.f32 %v501, %v517
        %v519 = vmul.f32 %v502, %v517
        %v520 = vmul.f32 %v503, %v517
        %v521 = vmul.f32 %v504, %v517
        %v522 = vmul.f32 %v505, %v517
        %v523 = vmul.f32 %v506, %v517
        %v524 = vmul.f32 %v507, %v517
        %v525 = vmul.f32 %v508, %v517
        %v526 = vmul.f32 %v509, %v517
        %v527 = vmul.f32 %v510, %v517
        %v528 = vmul.f32 %v511, %v517
        %v529 = vmul.f32 %v512, %v517
        %v530 = vmul.f32 %v513, %v517
        %v531 = vmul.f32 %v514, %v517
        %v532 = vmul.f32 %v515, %v517
        %v533 = vmul.f32 %v516, %v517
        %v534 = vpack.c.bf16 %v519, %v518
        %v535 = vpack.c.bf16 %v521, %v520
        %v536 = vpack.c.bf16 %v523, %v522
        %v537 = vpack.c.bf16 %v525, %v524
        %v538 = vpack.c.bf16 %v527, %v526
        %v539 = vpack.c.bf16 %v529, %v528
        %v540 = vpack.c.bf16 %v531, %v530
        %v541 = vpack.c.bf16 %v533, %v532
        %v542 = vld [vmem:[%s378] sm:$0xff]
        %v543 = vld [vmem:[%s378 + $0x8] sm:$0xff]
        %v544 = vld [vmem:[%s378 + $0x10] sm:$0xff]
        %v545 = vld [vmem:[%s378 + $0x18] sm:$0xff]
        %v546 = vld [vmem:[%s378 + $0x20] sm:$0xff]
        %v547 = vld [vmem:[%s378 + $0x28] sm:$0xff]
        %v548 = vld [vmem:[%s378 + $0x30] sm:$0xff]
        %v549 = vld [vmem:[%s378 + $0x38] sm:$0xff]
        %v550 = vld [vmem:[%s378 + $0x40] sm:$0xff]
        %v551 = vld [vmem:[%s378 + $0x48] sm:$0xff]
        %v552 = vld [vmem:[%s378 + $0x50] sm:$0xff]
        %v553 = vld [vmem:[%s378 + $0x58] sm:$0xff]
        %v554 = vld [vmem:[%s378 + $0x60] sm:$0xff]
        %v555 = vld [vmem:[%s378 + $0x68] sm:$0xff]
        %v556 = vld [vmem:[%s378 + $0x70] sm:$0xff]
        %v557 = vld [vmem:[%s378 + $0x78] sm:$0xff]
        %v558 = vpack.c.bf16 %v543, %v542
        %v559 = vpack.c.bf16 %v545, %v544
        %v560 = vpack.c.bf16 %v547, %v546
        %v561 = vpack.c.bf16 %v549, %v548
        %v562 = vpack.c.bf16 %v551, %v550
        %v563 = vpack.c.bf16 %v553, %v552
        %v564 = vpack.c.bf16 %v555, %v554
        %v565 = vpack.c.bf16 %v557, %v556
        %vm566 = vcmask 523264
        %v568 = vsel %vm566, %v534, 0
        %v571 = vsel %vm566, %v535, 0
        %v574 = vsel %vm566, %v536, 0
        %v577 = vsel %vm566, %v537, 0
        %v580 = vsel %vm566, %v538, 0
        %v583 = vsel %vm566, %v539, 0
        %v586 = vsel %vm566, %v540, 0
        %v589 = vsel %vm566, %v541, 0
        %v592 = vsel %vm566, %v558, 0
        %v595 = vsel %vm566, %v559, 0
        %v598 = vsel %vm566, %v560, 0
        %v601 = vsel %vm566, %v561, 0
        %v604 = vsel %vm566, %v562, 0
        %v607 = vsel %vm566, %v563, 0
        %v610 = vsel %vm566, %v564, 0
        %v613 = vsel %vm566, %v565, 0
        %615 = vmatprep.subr.bf16.mxu0 0
        %616 = vmatpush1.bf16.xpose.msra.mxu0 %v592
        %617 = vmatprep.subr.bf16.mxu0 0
        %618 = vmatpush1.bf16.xpose.msra.mxu0 %v595
        %619 = vmatprep.subr.bf16.mxu0 0
        %620 = vmatpush1.bf16.xpose.msra.mxu0 %v598
        %621 = vmatprep.subr.bf16.mxu0 0
        %622 = vmatpush1.bf16.xpose.msra.mxu0 %v601
        %623 = vmatprep.subr.bf16.mxu0 0
        %624 = vmatpush1.bf16.xpose.msra.mxu0 %v604
        %625 = vmatprep.subr.bf16.mxu0 0
        %626 = vmatpush1.bf16.xpose.msra.mxu0 %v607
        %627 = vmatprep.subr.bf16.mxu0 0
        %628 = vmatpush1.bf16.xpose.msra.mxu0 %v610
        %629 = vmatprep.subr.bf16.mxu0 0
        %630 = vmatpush1.bf16.xpose.msra.mxu0 %v613
        %631 = vmatprep.subr.bf16.mxu0 0
        %632 = vmatpush1.bf16.xpose.msra.mxu0 0
        %633 = vmatprep.subr.bf16.mxu0 0
        %634 = vmatpush1.bf16.xpose.msra.mxu0 0
        %635 = vmatprep.subr.bf16.mxu0 0
        %636 = vmatpush1.bf16.xpose.msra.mxu0 0
        %637 = vmatprep.subr.bf16.mxu0 0
        %638 = vmatpush1.bf16.xpose.msra.mxu0 0
        %639 = vmatprep.subr.bf16.mxu0 0
        %640 = vmatpush1.bf16.xpose.msra.mxu0 0
        %641 = vmatprep.subr.bf16.mxu0 0
        %642 = vmatpush1.bf16.xpose.msra.mxu0 0
        %643 = vmatprep.subr.bf16.mxu0 0
        %644 = vmatpush1.bf16.xpose.msra.mxu0 0
        %645 = vmatprep.subr.bf16.mxu0 0
        %646 = vmatpush1.bf16.xpose.msra.mxu0 0
        %647 = vmatprep.mubr.bf16.mxu0 0
        %648 = vmatmul.mubr.bf16.gmra.mrb[0].mxu0 %v568
        %v649 = vpop.f32.mrb[0].mxu0
        %v650 = vadd.f32 0.0, %v649
        %v651 = vpop.f32.mrb[0].mxu0
        %v652 = vpop.f32.mrb[0].mxu0
        %v653 = vadd.f32 0.0, %v652
        %v654 = vpop.f32.mrb[0].mxu0
        %655 = vmatprep.mubr.bf16.mxu0 0
        %656 = vmatmul.mubr.bf16.gmra.mrb[0].mxu0 %v571
        %v657 = vpop.f32.mrb[0].mxu0
        %v658 = vadd.f32 0.0, %v657
        %v659 = vpop.f32.mrb[0].mxu0
        %v660 = vpop.f32.mrb[0].mxu0
        %v661 = vadd.f32 0.0, %v660
        %v662 = vpop.f32.mrb[0].mxu0
        %663 = vmatprep.mubr.bf16.mxu0 0
        %664 = vmatmul.mubr.bf16.gmra.mrb[0].mxu0 %v574
        %v665 = vpop.f32.mrb[0].mxu0
        %v666 = vadd.f32 0.0, %v665
        %v667 = vpop.f32.mrb[0].mxu0
        %v668 = vpop.f32.mrb[0].mxu0
        %v669 = vadd.f32 0.0, %v668
        %v670 = vpop.f32.mrb[0].mxu0
        %671 = vmatprep.mubr.bf16.mxu0 0
        %672 = vmatmul.mubr.bf16.gmra.mrb[0].mxu0 %v577
        %v673 = vpop.f32.mrb[0].mxu0
        %v674 = vadd.f32 0.0, %v673
        %v675 = vpop.f32.mrb[0].mxu0
        %v676 = vpop.f32.mrb[0].mxu0
        %v677 = vadd.f32 0.0, %v676
        %v678 = vpop.f32.mrb[0].mxu0
        %679 = vmatprep.mubr.bf16.mxu0 0
        %680 = vmatmul.mubr.bf16.gmra.mrb[0].mxu0 %v580
        %v681 = vpop.f32.mrb[0].mxu0
        %v682 = vadd.f32 0.0, %v681
        %v683 = vpop.f32.mrb[0].mxu0
        %v684 = vpop.f32.mrb[0].mxu0
        %v685 = vadd.f32 0.0, %v684
        %v686 = vpop.f32.mrb[0].mxu0
        %687 = vmatprep.mubr.bf16.mxu0 0
        %688 = vmatmul.mubr.bf16.gmra.mrb[0].mxu0 %v583
        %v689 = vpop.f32.mrb[0].mxu0
        %v690 = vadd.f32 0.0, %v689
        %v691 = vpop.f32.mrb[0].mxu0
        %v692 = vpop.f32.mrb[0].mxu0
        %v693 = vadd.f32 0.0, %v692
        %v694 = vpop.f32.mrb[0].mxu0
        %695 = vmatprep.mubr.bf16.mxu0 0
        %696 = vmatmul.mubr.bf16.gmra.mrb[0].mxu0 %v586
        %v697 = vpop.f32.mrb[0].mxu0
        %v698 = vadd.f32 0.0, %v697
        %v699 = vpop.f32.mrb[0].mxu0
        %v700 = vpop.f32.mrb[0].mxu0
        %v701 = vadd.f32 0.0, %v700
        %v702 = vpop.f32.mrb[0].mxu0
        %703 = vmatprep.mubr.bf16.mxu0 0
        %704 = vmatmul.mubr.bf16.gmra.mrb[0].mxu0 %v589
        %v705 = vpop.f32.mrb[0].mxu0
        %v706 = vadd.f32 0.0, %v705
        %v707 = vpop.f32.mrb[0].mxu0
        %v708 = vpop.f32.mrb[0].mxu0
        %v709 = vadd.f32 0.0, %v708
        %v710 = vpop.f32.mrb[0].mxu0
        %711 = vdwg.mxu0
        %v712 = vld [vmem:[#allocation2] sm:$0xff]
        %v713 = vld [vmem:[#allocation2 + $0x8] sm:$0xff]
        %v714 = vld [vmem:[#allocation2 + $0x10] sm:$0xff]
        %v715 = vld [vmem:[#allocation2 + $0x18] sm:$0xff]
        %v716 = vld [vmem:[#allocation2 + $0x20] sm:$0xff]
        %v717 = vld [vmem:[#allocation2 + $0x28] sm:$0xff]
        %v718 = vld [vmem:[#allocation2 + $0x30] sm:$0xff]
        %v719 = vld [vmem:[#allocation2 + $0x38] sm:$0xff]
        %v720 = vld [vmem:[#allocation2 + $0x40] sm:$0xff]
        %v721 = vld [vmem:[#allocation2 + $0x48] sm:$0xff]
        %v722 = vld [vmem:[#allocation2 + $0x50] sm:$0xff]
        %v723 = vld [vmem:[#allocation2 + $0x58] sm:$0xff]
        %v724 = vld [vmem:[#allocation2 + $0x60] sm:$0xff]
        %v725 = vld [vmem:[#allocation2 + $0x68] sm:$0xff]
        %v726 = vld [vmem:[#allocation2 + $0x70] sm:$0xff]
        %v727 = vld [vmem:[#allocation2 + $0x78] sm:$0xff]
        %728 = vmax.xlane.f32.xlu0 %v650
        %v729 = vpop.xlane.xlu0 %728
        %730 = vmax.xlane.f32.xlu0 %v653
        %v731 = vpop.xlane.xlu0 %730
        %732 = vmax.xlane.f32.xlu0 %v658
        %v733 = vpop.xlane.xlu0 %732
        %734 = vmax.xlane.f32.xlu0 %v661
        %v735 = vpop.xlane.xlu0 %734
        %736 = vmax.xlane.f32.xlu0 %v666
        %v737 = vpop.xlane.xlu0 %736
        %738 = vmax.xlane.f32.xlu0 %v669
        %v739 = vpop.xlane.xlu0 %738
        %740 = vmax.xlane.f32.xlu0 %v674
        %v741 = vpop.xlane.xlu0 %740
        %742 = vmax.xlane.f32.xlu0 %v677
        %v743 = vpop.xlane.xlu0 %742
        %744 = vmax.xlane.f32.xlu0 %v682
        %v745 = vpop.xlane.xlu0 %744
        %746 = vmax.xlane.f32.xlu0 %v685
        %v747 = vpop.xlane.xlu0 %746
        %748 = vmax.xlane.f32.xlu0 %v690
        %v749 = vpop.xlane.xlu0 %748
        %750 = vmax.xlane.f32.xlu0 %v693
        %v751 = vpop.xlane.xlu0 %750
        %752 = vmax.xlane.f32.xlu0 %v698
        %v753 = vpop.xlane.xlu0 %752
        %754 = vmax.xlane.f32.xlu0 %v701
        %v755 = vpop.xlane.xlu0 %754
        %756 = vmax.xlane.f32.xlu0 %v706
        %v757 = vpop.xlane.xlu0 %756
        %758 = vmax.xlane.f32.xlu0 %v709
        %v759 = vpop.xlane.xlu0 %758
        %v760 = vmax.f32 %v712, %v729
        %v761 = vmax.f32 %v713, %v731
        %v762 = vmax.f32 %v714, %v733
        %v763 = vmax.f32 %v715, %v735
        %v764 = vmax.f32 %v716, %v737
        %v765 = vmax.f32 %v717, %v739
        %v766 = vmax.f32 %v718, %v741
        %v767 = vmax.f32 %v719, %v743
        %v768 = vmax.f32 %v720, %v745
        %v769 = vmax.f32 %v721, %v747
        %v770 = vmax.f32 %v722, %v749
        %v771 = vmax.f32 %v723, %v751
        %v772 = vmax.f32 %v724, %v753
        %v773 = vmax.f32 %v725, %v755
        %v774 = vmax.f32 %v726, %v757
        %v775 = vmax.f32 %v727, %v759
        %v776 = vsub.f32 %v712, %v760
        %v777 = vsub.f32 %v713, %v761
        %v778 = vsub.f32 %v714, %v762
        %v779 = vsub.f32 %v715, %v763
        %v780 = vsub.f32 %v716, %v764
        %v781 = vsub.f32 %v717, %v765
        %v782 = vsub.f32 %v718, %v766
        %v783 = vsub.f32 %v719, %v767
        %v784 = vsub.f32 %v720, %v768
        %v785 = vsub.f32 %v721, %v769
        %v786 = vsub.f32 %v722, %v770
        %v787 = vsub.f32 %v723, %v771
        %v788 = vsub.f32 %v724, %v772
        %v789 = vsub.f32 %v725, %v773
        %v790 = vsub.f32 %v726, %v774
        %v791 = vsub.f32 %v727, %v775
        %v792 = vmul.f32 %v776, 1.442695
        %v793 = vpow.pop %v792
        %v794 = vmul.f32 %v777, 1.442695
        %v795 = vpow.pop %v794
        %v796 = vmul.f32 %v778, 1.442695
        %v797 = vpow.pop %v796
        %v798 = vmul.f32 %v779, 1.442695
        %v799 = vpow.pop %v798
        %v800 = vmul.f32 %v780, 1.442695
        %v801 = vpow.pop %v800
        %v802 = vmul.f32 %v781, 1.442695
        %v803 = vpow.pop %v802
        %v804 = vmul.f32 %v782, 1.442695
        %v805 = vpow.pop %v804
        %v806 = vmul.f32 %v783, 1.442695
        %v807 = vpow.pop %v806
        %v808 = vmul.f32 %v784, 1.442695
        %v809 = vpow.pop %v808
        %v810 = vmul.f32 %v785, 1.442695
        %v811 = vpow.pop %v810
        %v812 = vmul.f32 %v786, 1.442695
        %v813 = vpow.pop %v812
        %v814 = vmul.f32 %v787, 1.442695
        %v815 = vpow.pop %v814
        %v816 = vmul.f32 %v788, 1.442695
        %v817 = vpow.pop %v816
        %v818 = vmul.f32 %v789, 1.442695
        %v819 = vpow.pop %v818
        %v820 = vmul.f32 %v790, 1.442695
        %v821 = vpow.pop %v820
        %v822 = vmul.f32 %v791, 1.442695
        %v823 = vpow.pop %v822
        %825 = vset.pattern.permute.xlu0 0
        %826 = vperm.xlu0 %825, %v760
        %v827 = vpop.permute.xlu0 %826
        %830 = vset.pattern.permute.xlu0 0
        %831 = vperm.xlu0 %830, %v761
        %v832 = vpop.permute.xlu0 %831
        %835 = vset.pattern.permute.xlu0 0
        %836 = vperm.xlu0 %835, %v762
        %v837 = vpop.permute.xlu0 %836
        %840 = vset.pattern.permute.xlu0 0
        %841 = vperm.xlu0 %840, %v763
        %v842 = vpop.permute.xlu0 %841
        %845 = vset.pattern.permute.xlu0 0
        %846 = vperm.xlu0 %845, %v764
        %v847 = vpop.permute.xlu0 %846
        %850 = vset.pattern.permute.xlu0 0
        %851 = vperm.xlu0 %850, %v765
        %v852 = vpop.permute.xlu0 %851
        %855 = vset.pattern.permute.xlu0 0
        %856 = vperm.xlu0 %855, %v766
        %v857 = vpop.permute.xlu0 %856
        %860 = vset.pattern.permute.xlu0 0
        %861 = vperm.xlu0 %860, %v767
        %v862 = vpop.permute.xlu0 %861
        %865 = vset.pattern.permute.xlu0 0
        %866 = vperm.xlu0 %865, %v768
        %v867 = vpop.permute.xlu0 %866
        %870 = vset.pattern.permute.xlu0 0
        %871 = vperm.xlu0 %870, %v769
        %v872 = vpop.permute.xlu0 %871
        %875 = vset.pattern.permute.xlu0 0
        %876 = vperm.xlu0 %875, %v770
        %v877 = vpop.permute.xlu0 %876
        %880 = vset.pattern.permute.xlu0 0
        %881 = vperm.xlu0 %880, %v771
        %v882 = vpop.permute.xlu0 %881
        %885 = vset.pattern.permute.xlu0 0
        %886 = vperm.xlu0 %885, %v772
        %v887 = vpop.permute.xlu0 %886
        %890 = vset.pattern.permute.xlu0 0
        %891 = vperm.xlu0 %890, %v773
        %v892 = vpop.permute.xlu0 %891
        %895 = vset.pattern.permute.xlu0 0
        %896 = vperm.xlu0 %895, %v774
        %v897 = vpop.permute.xlu0 %896
        %900 = vset.pattern.permute.xlu0 0
        %901 = vperm.xlu0 %900, %v775
        %v902 = vpop.permute.xlu0 %901
        %v904 = vsub.f32 %v650, %v827
        %v905 = vsub.f32 %v653, %v832
        %v906 = vsub.f32 %v658, %v837
        %v907 = vsub.f32 %v661, %v842
        %v908 = vsub.f32 %v666, %v847
        %v909 = vsub.f32 %v669, %v852
        %v910 = vsub.f32 %v674, %v857
        %v911 = vsub.f32 %v677, %v862
        %v912 = vsub.f32 %v682, %v867
        %v913 = vsub.f32 %v685, %v872
        %v914 = vsub.f32 %v690, %v877
        %v915 = vsub.f32 %v693, %v882
        %v916 = vsub.f32 %v698, %v887
        %v917 = vsub.f32 %v701, %v892
        %v918 = vsub.f32 %v706, %v897
        %v919 = vsub.f32 %v709, %v902
        %v920 = vmul.f32 %v904, 1.442695
        %v921 = vpow.pop %v920
        %v922 = vmul.f32 %v905, 1.442695
        %v923 = vpow.pop %v922
        %v924 = vmul.f32 %v906, 1.442695
        %v925 = vpow.pop %v924
        %v926 = vmul.f32 %v907, 1.442695
        %v927 = vpow.pop %v926
        %v928 = vmul.f32 %v908, 1.442695
        %v929 = vpow.pop %v928
        %v930 = vmul.f32 %v909, 1.442695
        %v931 = vpow.pop %v930
        %v932 = vmul.f32 %v910, 1.442695
        %v933 = vpow.pop %v932
        %v934 = vmul.f32 %v911, 1.442695
        %v935 = vpow.pop %v934
        %v936 = vmul.f32 %v912, 1.442695
        %v937 = vpow.pop %v936
        %v938 = vmul.f32 %v913, 1.442695
        %v939 = vpow.pop %v938
        %v940 = vmul.f32 %v914, 1.442695
        %v941 = vpow.pop %v940
        %v942 = vmul.f32 %v915, 1.442695
        %v943 = vpow.pop %v942
        %v944 = vmul.f32 %v916, 1.442695
        %v945 = vpow.pop %v944
        %v946 = vmul.f32 %v917, 1.442695
        %v947 = vpow.pop %v946
        %v948 = vmul.f32 %v918, 1.442695
        %v949 = vpow.pop %v948
        %v950 = vmul.f32 %v919, 1.442695
        %v951 = vpow.pop %v950
        %v952 = vld [vmem:[#allocation3] sm:$0xff]
        %v953 = vld [vmem:[#allocation3 + $0x8] sm:$0xff]
        %v954 = vld [vmem:[#allocation3 + $0x10] sm:$0xff]
        %v955 = vld [vmem:[#allocation3 + $0x18] sm:$0xff]
        %v956 = vld [vmem:[#allocation3 + $0x20] sm:$0xff]
        %v957 = vld [vmem:[#allocation3 + $0x28] sm:$0xff]
        %v958 = vld [vmem:[#allocation3 + $0x30] sm:$0xff]
        %v959 = vld [vmem:[#allocation3 + $0x38] sm:$0xff]
        %v960 = vld [vmem:[#allocation3 + $0x40] sm:$0xff]
        %v961 = vld [vmem:[#allocation3 + $0x48] sm:$0xff]
        %v962 = vld [vmem:[#allocation3 + $0x50] sm:$0xff]
        %v963 = vld [vmem:[#allocation3 + $0x58] sm:$0xff]
        %v964 = vld [vmem:[#allocation3 + $0x60] sm:$0xff]
        %v965 = vld [vmem:[#allocation3 + $0x68] sm:$0xff]
        %v966 = vld [vmem:[#allocation3 + $0x70] sm:$0xff]
        %v967 = vld [vmem:[#allocation3 + $0x78] sm:$0xff]
        %v968 = vmul.f32 %v793, %v952
        %v969 = vmul.f32 %v795, %v953
        %v970 = vmul.f32 %v797, %v954
        %v971 = vmul.f32 %v799, %v955
        %v972 = vmul.f32 %v801, %v956
        %v973 = vmul.f32 %v803, %v957
        %v974 = vmul.f32 %v805, %v958
        %v975 = vmul.f32 %v807, %v959
        %v976 = vmul.f32 %v809, %v960
        %v977 = vmul.f32 %v811, %v961
        %v978 = vmul.f32 %v813, %v962
        %v979 = vmul.f32 %v815, %v963
        %v980 = vmul.f32 %v817, %v964
        %v981 = vmul.f32 %v819, %v965
        %v982 = vmul.f32 %v821, %v966
        %v983 = vmul.f32 %v823, %v967
        %984 = vadd.xlane.f32.xlu0 %v921
        %v985 = vpop.xlane.xlu0 %984
        %986 = vadd.xlane.f32.xlu0 %v923
        %v987 = vpop.xlane.xlu0 %986
        %988 = vadd.xlane.f32.xlu0 %v925
        %v989 = vpop.xlane.xlu0 %988
        %990 = vadd.xlane.f32.xlu0 %v927
        %v991 = vpop.xlane.xlu0 %990
        %992 = vadd.xlane.f32.xlu0 %v929
        %v993 = vpop.xlane.xlu0 %992
        %994 = vadd.xlane.f32.xlu0 %v931
        %v995 = vpop.xlane.xlu0 %994
        %996 = vadd.xlane.f32.xlu0 %v933
        %v997 = vpop.xlane.xlu0 %996
        %998 = vadd.xlane.f32.xlu0 %v935
        %v999 = vpop.xlane.xlu0 %998
        %1000 = vadd.xlane.f32.xlu0 %v937
        %v1001 = vpop.xlane.xlu0 %1000
        %1002 = vadd.xlane.f32.xlu0 %v939
        %v1003 = vpop.xlane.xlu0 %1002
        %1004 = vadd.xlane.f32.xlu0 %v941
        %v1005 = vpop.xlane.xlu0 %1004
        %1006 = vadd.xlane.f32.xlu0 %v943
        %v1007 = vpop.xlane.xlu0 %1006
        %1008 = vadd.xlane.f32.xlu0 %v945
        %v1009 = vpop.xlane.xlu0 %1008
        %1010 = vadd.xlane.f32.xlu0 %v947
        %v1011 = vpop.xlane.xlu0 %1010
        %1012 = vadd.xlane.f32.xlu0 %v949
        %v1013 = vpop.xlane.xlu0 %1012
        %1014 = vadd.xlane.f32.xlu0 %v951
        %v1015 = vpop.xlane.xlu0 %1014
        %v1016 = vadd.f32 %v968, %v985
        %v1017 = vadd.f32 %v969, %v987
        %v1018 = vadd.f32 %v970, %v989
        %v1019 = vadd.f32 %v971, %v991
        %v1020 = vadd.f32 %v972, %v993
        %v1021 = vadd.f32 %v973, %v995
        %v1022 = vadd.f32 %v974, %v997
        %v1023 = vadd.f32 %v975, %v999
        %v1024 = vadd.f32 %v976, %v1001
        %v1025 = vadd.f32 %v977, %v1003
        %v1026 = vadd.f32 %v978, %v1005
        %v1027 = vadd.f32 %v979, %v1007
        %v1028 = vadd.f32 %v980, %v1009
        %v1029 = vadd.f32 %v981, %v1011
        %v1030 = vadd.f32 %v982, %v1013
        %v1031 = vadd.f32 %v983, %v1015
        %vm1032 = vcmask 7168
        %1033 = vst.msk [vmem:[#allocation3] sm:$0xff] %vm1032, %v1016
        %1034 = vst.msk [vmem:[#allocation3 + $0x8] sm:$0xff] %vm1032, %v1017
        %1035 = vst.msk [vmem:[#allocation3 + $0x10] sm:$0xff] %vm1032, %v1018
        %1036 = vst.msk [vmem:[#allocation3 + $0x18] sm:$0xff] %vm1032, %v1019
        %1037 = vst.msk [vmem:[#allocation3 + $0x20] sm:$0xff] %vm1032, %v1020
        %1038 = vst.msk [vmem:[#allocation3 + $0x28] sm:$0xff] %vm1032, %v1021
        %1039 = vst.msk [vmem:[#allocation3 + $0x30] sm:$0xff] %vm1032, %v1022
        %1040 = vst.msk [vmem:[#allocation3 + $0x38] sm:$0xff] %vm1032, %v1023
        %1041 = vst.msk [vmem:[#allocation3 + $0x40] sm:$0xff] %vm1032, %v1024
        %1042 = vst.msk [vmem:[#allocation3 + $0x48] sm:$0xff] %vm1032, %v1025
        %1043 = vst.msk [vmem:[#allocation3 + $0x50] sm:$0xff] %vm1032, %v1026
        %1044 = vst.msk [vmem:[#allocation3 + $0x58] sm:$0xff] %vm1032, %v1027
        %1045 = vst.msk [vmem:[#allocation3 + $0x60] sm:$0xff] %vm1032, %v1028
        %1046 = vst.msk [vmem:[#allocation3 + $0x68] sm:$0xff] %vm1032, %v1029
        %1047 = vst.msk [vmem:[#allocation3 + $0x70] sm:$0xff] %vm1032, %v1030
        %1048 = vst.msk [vmem:[#allocation3 + $0x78] sm:$0xff] %vm1032, %v1031
        %v1049 = vld [vmem:[%s396] sm:$0xff]
        %v1050 = vld [vmem:[%s396 + $0x8] sm:$0xff]
        %v1051 = vld [vmem:[%s396 + $0x10] sm:$0xff]
        %v1052 = vld [vmem:[%s396 + $0x18] sm:$0xff]
        %v1053 = vld [vmem:[%s396 + $0x20] sm:$0xff]
        %v1054 = vld [vmem:[%s396 + $0x28] sm:$0xff]
        %v1055 = vld [vmem:[%s396 + $0x30] sm:$0xff]
        %v1056 = vld [vmem:[%s396 + $0x38] sm:$0xff]
        %v1057 = vld [vmem:[%s396 + $0x40] sm:$0xff]
        %v1058 = vld [vmem:[%s396 + $0x48] sm:$0xff]
        %v1059 = vld [vmem:[%s396 + $0x50] sm:$0xff]
        %v1060 = vld [vmem:[%s396 + $0x58] sm:$0xff]
        %v1061 = vld [vmem:[%s396 + $0x60] sm:$0xff]
        %v1062 = vld [vmem:[%s396 + $0x68] sm:$0xff]
        %v1063 = vld [vmem:[%s396 + $0x70] sm:$0xff]
        %v1064 = vld [vmem:[%s396 + $0x78] sm:$0xff]
        %s1065 = sld [smem:[#allocation5]]
        %v1066 = vstv %s1065
        %vm1067 = vcmp.ge.s32.totalorder %v1049, %v1066
        %vm1068 = vcmp.ge.s32.totalorder %v1050, %v1066
        %vm1069 = vcmp.ge.s32.totalorder %v1051, %v1066
        %vm1070 = vcmp.ge.s32.totalorder %v1052, %v1066
        %vm1071 = vcmp.ge.s32.totalorder %v1053, %v1066
        %vm1072 = vcmp.ge.s32.totalorder %v1054, %v1066
        %vm1073 = vcmp.ge.s32.totalorder %v1055, %v1066
        %vm1074 = vcmp.ge.s32.totalorder %v1056, %v1066
        %vm1075 = vcmp.ge.s32.totalorder %v1057, %v1066
        %vm1076 = vcmp.ge.s32.totalorder %v1058, %v1066
        %vm1077 = vcmp.ge.s32.totalorder %v1059, %v1066
        %vm1078 = vcmp.ge.s32.totalorder %v1060, %v1066
        %vm1079 = vcmp.ge.s32.totalorder %v1061, %v1066
        %vm1080 = vcmp.ge.s32.totalorder %v1062, %v1066
        %vm1081 = vcmp.ge.s32.totalorder %v1063, %v1066
        %vm1082 = vcmp.ge.s32.totalorder %v1064, %v1066
        %v1083 = vsel %vm1067, %v921, 0.0
        %v1084 = vsel %vm1068, %v923, 0.0
        %v1085 = vsel %vm1069, %v925, 0.0
        %v1086 = vsel %vm1070, %v927, 0.0
        %v1087 = vsel %vm1071, %v929, 0.0
        %v1088 = vsel %vm1072, %v931, 0.0
        %v1089 = vsel %vm1073, %v933, 0.0
        %v1090 = vsel %vm1074, %v935, 0.0
        %v1091 = vsel %vm1075, %v937, 0.0
        %v1092 = vsel %vm1076, %v939, 0.0
        %v1093 = vsel %vm1077, %v941, 0.0
        %v1094 = vsel %vm1078, %v943, 0.0
        %v1095 = vsel %vm1079, %v945, 0.0
        %v1096 = vsel %vm1080, %v947, 0.0
        %v1097 = vsel %vm1081, %v949, 0.0
        %v1098 = vsel %vm1082, %v951, 0.0
        %v1099 = vpack.c.bf16 %v1084, %v1083
        %v1100 = vpack.c.bf16 %v1086, %v1085
        %v1101 = vpack.c.bf16 %v1088, %v1087
        %v1102 = vpack.c.bf16 %v1090, %v1089
        %v1103 = vpack.c.bf16 %v1092, %v1091
        %v1104 = vpack.c.bf16 %v1094, %v1093
        %v1105 = vpack.c.bf16 %v1096, %v1095
        %v1106 = vpack.c.bf16 %v1098, %v1097
        %v1107 = vld [vmem:[#allocation4] sm:$0xff]
        %v1108 = vld [vmem:[#allocation4 + $0x8] sm:$0xff]
        %v1109 = vld [vmem:[#allocation4 + $0x10] sm:$0xff]
        %v1110 = vld [vmem:[#allocation4 + $0x18] sm:$0xff]
        %v1111 = vld [vmem:[#allocation4 + $0x20] sm:$0xff]
        %v1112 = vld [vmem:[#allocation4 + $0x28] sm:$0xff]
        %v1113 = vld [vmem:[#allocation4 + $0x30] sm:$0xff]
        %v1114 = vld [vmem:[#allocation4 + $0x38] sm:$0xff]
        %v1115 = vld [vmem:[#allocation4 + $0x40] sm:$0xff]
        %v1116 = vld [vmem:[#allocation4 + $0x48] sm:$0xff]
        %v1117 = vld [vmem:[#allocation4 + $0x50] sm:$0xff]
        %v1118 = vld [vmem:[#allocation4 + $0x58] sm:$0xff]
        %v1119 = vld [vmem:[#allocation4 + $0x60] sm:$0xff]
        %v1120 = vld [vmem:[#allocation4 + $0x68] sm:$0xff]
        %v1121 = vld [vmem:[#allocation4 + $0x70] sm:$0xff]
        %v1122 = vld [vmem:[#allocation4 + $0x78] sm:$0xff]
        %1124 = vset.pattern.permute.xlu0 0
        %1125 = vperm.xlu0 %1124, %v793
        %v1126 = vpop.permute.xlu0 %1125
        %1129 = vset.pattern.permute.xlu0 0
        %1130 = vperm.xlu0 %1129, %v795
        %v1131 = vpop.permute.xlu0 %1130
        %1134 = vset.pattern.permute.xlu0 0
        %1135 = vperm.xlu0 %1134, %v797
        %v1136 = vpop.permute.xlu0 %1135
        %1139 = vset.pattern.permute.xlu0 0
        %1140 = vperm.xlu0 %1139, %v799
        %v1141 = vpop.permute.xlu0 %1140
        %1144 = vset.pattern.permute.xlu0 0
        %1145 = vperm.xlu0 %1144, %v801
        %v1146 = vpop.permute.xlu0 %1145
        %1149 = vset.pattern.permute.xlu0 0
        %1150 = vperm.xlu0 %1149, %v803
        %v1151 = vpop.permute.xlu0 %1150
        %1154 = vset.pattern.permute.xlu0 0
        %1155 = vperm.xlu0 %1154, %v805
        %v1156 = vpop.permute.xlu0 %1155
        %1159 = vset.pattern.permute.xlu0 0
        %1160 = vperm.xlu0 %1159, %v807
        %v1161 = vpop.permute.xlu0 %1160
        %1164 = vset.pattern.permute.xlu0 0
        %1165 = vperm.xlu0 %1164, %v809
        %v1166 = vpop.permute.xlu0 %1165
        %1169 = vset.pattern.permute.xlu0 0
        %1170 = vperm.xlu0 %1169, %v811
        %v1171 = vpop.permute.xlu0 %1170
        %1174 = vset.pattern.permute.xlu0 0
        %1175 = vperm.xlu0 %1174, %v813
        %v1176 = vpop.permute.xlu0 %1175
        %1179 = vset.pattern.permute.xlu0 0
        %1180 = vperm.xlu0 %1179, %v815
        %v1181 = vpop.permute.xlu0 %1180
        %1184 = vset.pattern.permute.xlu0 0
        %1185 = vperm.xlu0 %1184, %v817
        %v1186 = vpop.permute.xlu0 %1185
        %1189 = vset.pattern.permute.xlu0 0
        %1190 = vperm.xlu0 %1189, %v819
        %v1191 = vpop.permute.xlu0 %1190
        %1194 = vset.pattern.permute.xlu0 0
        %1195 = vperm.xlu0 %1194, %v821
        %v1196 = vpop.permute.xlu0 %1195
        %1199 = vset.pattern.permute.xlu0 0
        %1200 = vperm.xlu0 %1199, %v823
        %v1201 = vpop.permute.xlu0 %1200
        %v1203 = vmul.f32 %v1126, %v1107
        %v1204 = vmul.f32 %v1131, %v1108
        %v1205 = vmul.f32 %v1136, %v1109
        %v1206 = vmul.f32 %v1141, %v1110
        %v1207 = vmul.f32 %v1146, %v1111
        %v1208 = vmul.f32 %v1151, %v1112
        %v1209 = vmul.f32 %v1156, %v1113
        %v1210 = vmul.f32 %v1161, %v1114
        %v1211 = vmul.f32 %v1166, %v1115
        %v1212 = vmul.f32 %v1171, %v1116
        %v1213 = vmul.f32 %v1176, %v1117
        %v1214 = vmul.f32 %v1181, %v1118
        %v1215 = vmul.f32 %v1186, %v1119
        %v1216 = vmul.f32 %v1191, %v1120
        %v1217 = vmul.f32 %v1196, %v1121
        %v1218 = vmul.f32 %v1201, %v1122
        %v1219 = vld [vmem:[%s387] sm:$0xff]
        %v1220 = vld [vmem:[%s387 + $0x8] sm:$0xff]
        %v1221 = vld [vmem:[%s387 + $0x10] sm:$0xff]
        %v1222 = vld [vmem:[%s387 + $0x18] sm:$0xff]
        %v1223 = vld [vmem:[%s387 + $0x20] sm:$0xff]
        %v1224 = vld [vmem:[%s387 + $0x28] sm:$0xff]
        %v1225 = vld [vmem:[%s387 + $0x30] sm:$0xff]
        %v1226 = vld [vmem:[%s387 + $0x38] sm:$0xff]
        %v1227 = vld [vmem:[%s387 + $0x40] sm:$0xff]
        %v1228 = vld [vmem:[%s387 + $0x48] sm:$0xff]
        %v1229 = vld [vmem:[%s387 + $0x50] sm:$0xff]
        %v1230 = vld [vmem:[%s387 + $0x58] sm:$0xff]
        %v1231 = vld [vmem:[%s387 + $0x60] sm:$0xff]
        %v1232 = vld [vmem:[%s387 + $0x68] sm:$0xff]
        %v1233 = vld [vmem:[%s387 + $0x70] sm:$0xff]
        %v1234 = vld [vmem:[%s387 + $0x78] sm:$0xff]
        %v1235 = vpack.c.bf16 %v1220, %v1219
        %v1236 = vpack.c.bf16 %v1222, %v1221
        %v1237 = vpack.c.bf16 %v1224, %v1223
        %v1238 = vpack.c.bf16 %v1226, %v1225
        %v1239 = vpack.c.bf16 %v1228, %v1227
        %v1240 = vpack.c.bf16 %v1230, %v1229
        %v1241 = vpack.c.bf16 %v1232, %v1231
        %v1242 = vpack.c.bf16 %v1234, %v1233
        %1243 = vmatprep.subr.bf16.mxu0 0
        %1244 = vmatpush1.bf16.msra.mxu0 %v1235
        %1245 = vmatprep.subr.bf16.mxu0 0
        %1246 = vmatpush1.bf16.msra.mxu0 %v1236
        %1247 = vmatprep.subr.bf16.mxu0 0
        %1248 = vmatpush1.bf16.msra.mxu0 %v1237
        %1249 = vmatprep.subr.bf16.mxu0 0
        %1250 = vmatpush1.bf16.msra.mxu0 %v1238
        %1251 = vmatprep.subr.bf16.mxu0 0
        %1252 = vmatpush1.bf16.msra.mxu0 %v1239
        %1253 = vmatprep.subr.bf16.mxu0 0
        %1254 = vmatpush1.bf16.msra.mxu0 %v1240
        %1255 = vmatprep.subr.bf16.mxu0 0
        %1256 = vmatpush1.bf16.msra.mxu0 %v1241
        %1257 = vmatprep.subr.bf16.mxu0 0
        %1258 = vmatpush1.bf16.msra.mxu0 %v1242
        %1259 = vmatprep.subr.bf16.mxu0 0
        %1260 = vmatpush1.bf16.msra.mxu0 0
        %1261 = vmatprep.subr.bf16.mxu0 0
        %1262 = vmatpush1.bf16.msra.mxu0 0
        %1263 = vmatprep.subr.bf16.mxu0 0
        %1264 = vmatpush1.bf16.msra.mxu0 0
        %1265 = vmatprep.subr.bf16.mxu0 0
        %1266 = vmatpush1.bf16.msra.mxu0 0
        %1267 = vmatprep.subr.bf16.mxu0 0
        %1268 = vmatpush1.bf16.msra.mxu0 0
        %1269 = vmatprep.subr.bf16.mxu0 0
        %1270 = vmatpush1.bf16.msra.mxu0 0
        %1271 = vmatprep.subr.bf16.mxu0 0
        %1272 = vmatpush1.bf16.msra.mxu0 0
        %1273 = vmatprep.subr.bf16.mxu0 0
        %1274 = vmatpush1.bf16.msra.mxu0 0
        %1275 = vmatprep.mubr.bf16.mxu0 0
        %1276 = vmatmul.mubr.bf16.gmra.mrb[0].mxu0 %v1099
        %v1277 = vpop.f32.mrb[0].mxu0
        %v1278 = vadd.f32 0.0, %v1277
        %v1279 = vpop.f32.mrb[0].mxu0
        %v1280 = vpop.f32.mrb[0].mxu0
        %v1281 = vadd.f32 0.0, %v1280
        %v1282 = vpop.f32.mrb[0].mxu0
        %1283 = vmatprep.mubr.bf16.mxu0 0
        %1284 = vmatmul.mubr.bf16.gmra.mrb[0].mxu0 %v1100
        %v1285 = vpop.f32.mrb[0].mxu0
        %v1286 = vadd.f32 0.0, %v1285
        %v1287 = vpop.f32.mrb[0].mxu0
        %v1288 = vpop.f32.mrb[0].mxu0
        %v1289 = vadd.f32 0.0, %v1288
        %v1290 = vpop.f32.mrb[0].mxu0
        %1291 = vmatprep.mubr.bf16.mxu0 0
        %1292 = vmatmul.mubr.bf16.gmra.mrb[0].mxu0 %v1101
        %v1293 = vpop.f32.mrb[0].mxu0
        %v1294 = vadd.f32 0.0, %v1293
        %v1295 = vpop.f32.mrb[0].mxu0
        %v1296 = vpop.f32.mrb[0].mxu0
        %v1297 = vadd.f32 0.0, %v1296
        %v1298 = vpop.f32.mrb[0].mxu0
        %1299 = vmatprep.mubr.bf16.mxu0 0
        %1300 = vmatmul.mubr.bf16.gmra.mrb[0].mxu0 %v1102
        %v1301 = vpop.f32.mrb[0].mxu0
        %v1302 = vadd.f32 0.0, %v1301
        %v1303 = vpop.f32.mrb[0].mxu0
        %v1304 = vpop.f32.mrb[0].mxu0
        %v1305 = vadd.f32 0.0, %v1304
        %v1306 = vpop.f32.mrb[0].mxu0
        %1307 = vmatprep.mubr.bf16.mxu0 0
        %1308 = vmatmul.mubr.bf16.gmra.mrb[0].mxu0 %v1103
        %v1309 = vpop.f32.mrb[0].mxu0
        %v1310 = vadd.f32 0.0, %v1309
        %v1311 = vpop.f32.mrb[0].mxu0
        %v1312 = vpop.f32.mrb[0].mxu0
        %v1313 = vadd.f32 0.0, %v1312
        %v1314 = vpop.f32.mrb[0].mxu0
        %1315 = vmatprep.mubr.bf16.mxu0 0
        %1316 = vmatmul.mubr.bf16.gmra.mrb[0].mxu0 %v1104
        %v1317 = vpop.f32.mrb[0].mxu0
        %v1318 = vadd.f32 0.0, %v1317
        %v1319 = vpop.f32.mrb[0].mxu0
        %v1320 = vpop.f32.mrb[0].mxu0
        %v1321 = vadd.f32 0.0, %v1320
        %v1322 = vpop.f32.mrb[0].mxu0
        %1323 = vmatprep.mubr.bf16.mxu0 0
        %1324 = vmatmul.mubr.bf16.gmra.mrb[0].mxu0 %v1105
        %v1325 = vpop.f32.mrb[0].mxu0
        %v1326 = vadd.f32 0.0, %v1325
        %v1327 = vpop.f32.mrb[0].mxu0
        %v1328 = vpop.f32.mrb[0].mxu0
        %v1329 = vadd.f32 0.0, %v1328
        %v1330 = vpop.f32.mrb[0].mxu0
        %1331 = vmatprep.mubr.bf16.mxu0 0
        %1332 = vmatmul.mubr.bf16.gmra.mrb[0].mxu0 %v1106
        %v1333 = vpop.f32.mrb[0].mxu0
        %v1334 = vadd.f32 0.0, %v1333
        %v1335 = vpop.f32.mrb[0].mxu0
        %v1336 = vpop.f32.mrb[0].mxu0
        %v1337 = vadd.f32 0.0, %v1336
        %v1338 = vpop.f32.mrb[0].mxu0
        %1339 = vdwg.mxu0
        %v1340 = vadd.f32 %v1203, %v1278
        %v1341 = vadd.f32 %v1204, %v1281
        %v1342 = vadd.f32 %v1205, %v1286
        %v1343 = vadd.f32 %v1206, %v1289
        %v1344 = vadd.f32 %v1207, %v1294
        %v1345 = vadd.f32 %v1208, %v1297
        %v1346 = vadd.f32 %v1209, %v1302
        %v1347 = vadd.f32 %v1210, %v1305
        %v1348 = vadd.f32 %v1211, %v1310
        %v1349 = vadd.f32 %v1212, %v1313
        %v1350 = vadd.f32 %v1213, %v1318
        %v1351 = vadd.f32 %v1214, %v1321
        %v1352 = vadd.f32 %v1215, %v1326
        %v1353 = vadd.f32 %v1216, %v1329
        %v1354 = vadd.f32 %v1217, %v1334
        %v1355 = vadd.f32 %v1218, %v1337
        %1356 = vst [vmem:[#allocation4] sm:$0xff] %v1340
        %1357 = vst [vmem:[#allocation4 + $0x8] sm:$0xff] %v1341
        %1358 = vst [vmem:[#allocation4 + $0x10] sm:$0xff] %v1342
        %1359 = vst [vmem:[#allocation4 + $0x18] sm:$0xff] %v1343
        %1360 = vst [vmem:[#allocation4 + $0x20] sm:$0xff] %v1344
        %1361 = vst [vmem:[#allocation4 + $0x28] sm:$0xff] %v1345
        %1362 = vst [vmem:[#allocation4 + $0x30] sm:$0xff] %v1346
        %1363 = vst [vmem:[#allocation4 + $0x38] sm:$0xff] %v1347
        %1364 = vst [vmem:[#allocation4 + $0x40] sm:$0xff] %v1348
        %1365 = vst [vmem:[#allocation4 + $0x48] sm:$0xff] %v1349
        %1366 = vst [vmem:[#allocation4 + $0x50] sm:$0xff] %v1350
        %1367 = vst [vmem:[#allocation4 + $0x58] sm:$0xff] %v1351
        %1368 = vst [vmem:[#allocation4 + $0x60] sm:$0xff] %v1352
        %1369 = vst [vmem:[#allocation4 + $0x68] sm:$0xff] %v1353
        %1370 = vst [vmem:[#allocation4 + $0x70] sm:$0xff] %v1354
        %1371 = vst [vmem:[#allocation4 + $0x78] sm:$0xff] %v1355
        %1372 = vst.msk [vmem:[#allocation2] sm:$0xff] %vm1032, %v760
        %1373 = vst.msk [vmem:[#allocation2 + $0x8] sm:$0xff] %vm1032, %v761
        %1374 = vst.msk [vmem:[#allocation2 + $0x10] sm:$0xff] %vm1032, %v762
        %1375 = vst.msk [vmem:[#allocation2 + $0x18] sm:$0xff] %vm1032, %v763
        %1376 = vst.msk [vmem:[#allocation2 + $0x20] sm:$0xff] %vm1032, %v764
        %1377 = vst.msk [vmem:[#allocation2 + $0x28] sm:$0xff] %vm1032, %v765
        %1378 = vst.msk [vmem:[#allocation2 + $0x30] sm:$0xff] %vm1032, %v766
        %1379 = vst.msk [vmem:[#allocation2 + $0x38] sm:$0xff] %vm1032, %v767
        %1380 = vst.msk [vmem:[#allocation2 + $0x40] sm:$0xff] %vm1032, %v768
        %1381 = vst.msk [vmem:[#allocation2 + $0x48] sm:$0xff] %vm1032, %v769
        %1382 = vst.msk [vmem:[#allocation2 + $0x50] sm:$0xff] %vm1032, %v770
        %1383 = vst.msk [vmem:[#allocation2 + $0x58] sm:$0xff] %vm1032, %v771
        %1384 = vst.msk [vmem:[#allocation2 + $0x60] sm:$0xff] %vm1032, %v772
        %1385 = vst.msk [vmem:[#allocation2 + $0x68] sm:$0xff] %vm1032, %v773
        %1386 = vst.msk [vmem:[#allocation2 + $0x70] sm:$0xff] %vm1032, %v774
        %1387 = vst.msk [vmem:[#allocation2 + $0x78] sm:$0xff] %vm1032, %v775
        %p1388 = scmp.eq.s32.totalorder %s38, 1
        // Predicated region
        $region69: #{sdpa_dropout.1} parent=43 // pred_check
          %p1389 = pneg %p1388
        $region70: #{sdpa_dropout.1} parent=43 // pred_check_branch
          %1391 = sbr.rel (%p1389) target = $region72
        $region71: #{sdpa_dropout.1} parent=43 // pred_region
          %s1392 = sld [smem:[#allocation6 + $0x1]]
          %v1393 = vld [vmem:[#allocation3] sm:$0xff]
          %v1394 = vld [vmem:[#allocation3 + $0x8] sm:$0xff]
          %v1395 = vld [vmem:[#allocation3 + $0x10] sm:$0xff]
          %v1396 = vld [vmem:[#allocation3 + $0x18] sm:$0xff]
          %v1397 = vld [vmem:[#allocation3 + $0x20] sm:$0xff]
          %v1398 = vld [vmem:[#allocation3 + $0x28] sm:$0xff]
          %v1399 = vld [vmem:[#allocation3 + $0x30] sm:$0xff]
          %v1400 = vld [vmem:[#allocation3 + $0x38] sm:$0xff]
          %v1401 = vld [vmem:[#allocation3 + $0x40] sm:$0xff]
          %v1402 = vld [vmem:[#allocation3 + $0x48] sm:$0xff]
          %v1403 = vld [vmem:[#allocation3 + $0x50] sm:$0xff]
          %v1404 = vld [vmem:[#allocation3 + $0x58] sm:$0xff]
          %v1405 = vld [vmem:[#allocation3 + $0x60] sm:$0xff]
          %v1406 = vld [vmem:[#allocation3 + $0x68] sm:$0xff]
          %v1407 = vld [vmem:[#allocation3 + $0x70] sm:$0xff]
          %v1408 = vld [vmem:[#allocation3 + $0x78] sm:$0xff]
          %v1409 = vrcp.pop %v1393
          %v1410 = vrcp.pop %v1394
          %v1411 = vrcp.pop %v1395
          %v1412 = vrcp.pop %v1396
          %v1413 = vrcp.pop %v1397
          %v1414 = vrcp.pop %v1398
          %v1415 = vrcp.pop %v1399
          %v1416 = vrcp.pop %v1400
          %v1417 = vrcp.pop %v1401
          %v1418 = vrcp.pop %v1402
          %v1419 = vrcp.pop %v1403
          %v1420 = vrcp.pop %v1404
          %v1421 = vrcp.pop %v1405
          %v1422 = vrcp.pop %v1406
          %v1423 = vrcp.pop %v1407
          %v1424 = vrcp.pop %v1408
          %v1425 = vld [vmem:[#allocation4] sm:$0xff]
          %v1426 = vld [vmem:[#allocation4 + $0x8] sm:$0xff]
          %v1427 = vld [vmem:[#allocation4 + $0x10] sm:$0xff]
          %v1428 = vld [vmem:[#allocation4 + $0x18] sm:$0xff]
          %v1429 = vld [vmem:[#allocation4 + $0x20] sm:$0xff]
          %v1430 = vld [vmem:[#allocation4 + $0x28] sm:$0xff]
          %v1431 = vld [vmem:[#allocation4 + $0x30] sm:$0xff]
          %v1432 = vld [vmem:[#allocation4 + $0x38] sm:$0xff]
          %v1433 = vld [vmem:[#allocation4 + $0x40] sm:$0xff]
          %v1434 = vld [vmem:[#allocation4 + $0x48] sm:$0xff]
          %v1435 = vld [vmem:[#allocation4 + $0x50] sm:$0xff]
          %v1436 = vld [vmem:[#allocation4 + $0x58] sm:$0xff]
          %v1437 = vld [vmem:[#allocation4 + $0x60] sm:$0xff]
          %v1438 = vld [vmem:[#allocation4 + $0x68] sm:$0xff]
          %v1439 = vld [vmem:[#allocation4 + $0x70] sm:$0xff]
          %v1440 = vld [vmem:[#allocation4 + $0x78] sm:$0xff]
          %v1441 = vstv %s1392
          %v1442 = vmul.f32 %v1409, %v1441
          %v1443 = vmul.f32 %v1410, %v1441
          %v1444 = vmul.f32 %v1411, %v1441
          %v1445 = vmul.f32 %v1412, %v1441
          %v1446 = vmul.f32 %v1413, %v1441
          %v1447 = vmul.f32 %v1414, %v1441
          %v1448 = vmul.f32 %v1415, %v1441
          %v1449 = vmul.f32 %v1416, %v1441
          %v1450 = vmul.f32 %v1417, %v1441
          %v1451 = vmul.f32 %v1418, %v1441
          %v1452 = vmul.f32 %v1419, %v1441
          %v1453 = vmul.f32 %v1420, %v1441
          %v1454 = vmul.f32 %v1421, %v1441
          %v1455 = vmul.f32 %v1422, %v1441
          %v1456 = vmul.f32 %v1423, %v1441
          %v1457 = vmul.f32 %v1424, %v1441
          %1459 = vset.pattern.permute.xlu0 0
          %1460 = vperm.xlu0 %1459, %v1442
          %v1461 = vpop.permute.xlu0 %1460
          %1464 = vset.pattern.permute.xlu0 0
          %1465 = vperm.xlu0 %1464, %v1443
          %v1466 = vpop.permute.xlu0 %1465
          %1469 = vset.pattern.permute.xlu0 0
          %1470 = vperm.xlu0 %1469, %v1444
          %v1471 = vpop.permute.xlu0 %1470
          %1474 = vset.pattern.permute.xlu0 0
          %1475 = vperm.xlu0 %1474, %v1445
          %v1476 = vpop.permute.xlu0 %1475
          %1479 = vset.pattern.permute.xlu0 0
          %1480 = vperm.xlu0 %1479, %v1446
          %v1481 = vpop.permute.xlu0 %1480
          %1484 = vset.pattern.permute.xlu0 0
          %1485 = vperm.xlu0 %1484, %v1447
          %v1486 = vpop.permute.xlu0 %1485
          %1489 = vset.pattern.permute.xlu0 0
          %1490 = vperm.xlu0 %1489, %v1448
          %v1491 = vpop.permute.xlu0 %1490
          %1494 = vset.pattern.permute.xlu0 0
          %1495 = vperm.xlu0 %1494, %v1449
          %v1496 = vpop.permute.xlu0 %1495
          %1499 = vset.pattern.permute.xlu0 0
          %1500 = vperm.xlu0 %1499, %v1450
          %v1501 = vpop.permute.xlu0 %1500
          %1504 = vset.pattern.permute.xlu0 0
          %1505 = vperm.xlu0 %1504, %v1451
          %v1506 = vpop.permute.xlu0 %1505
          %1509 = vset.pattern.permute.xlu0 0
          %1510 = vperm.xlu0 %1509, %v1452
          %v1511 = vpop.permute.xlu0 %1510
          %1514 = vset.pattern.permute.xlu0 0
          %1515 = vperm.xlu0 %1514, %v1453
          %v1516 = vpop.permute.xlu0 %1515
          %1519 = vset.pattern.permute.xlu0 0
          %1520 = vperm.xlu0 %1519, %v1454
          %v1521 = vpop.permute.xlu0 %1520
          %1524 = vset.pattern.permute.xlu0 0
          %1525 = vperm.xlu0 %1524, %v1455
          %v1526 = vpop.permute.xlu0 %1525
          %1529 = vset.pattern.permute.xlu0 0
          %1530 = vperm.xlu0 %1529, %v1456
          %v1531 = vpop.permute.xlu0 %1530
          %1534 = vset.pattern.permute.xlu0 0
          %1535 = vperm.xlu0 %1534, %v1457
          %v1536 = vpop.permute.xlu0 %1535
          %v1538 = vmul.f32 %v1425, %v1461
          %v1539 = vmul.f32 %v1426, %v1466
          %v1540 = vmul.f32 %v1427, %v1471
          %v1541 = vmul.f32 %v1428, %v1476
          %v1542 = vmul.f32 %v1429, %v1481
          %v1543 = vmul.f32 %v1430, %v1486
          %v1544 = vmul.f32 %v1431, %v1491
          %v1545 = vmul.f32 %v1432, %v1496
          %v1546 = vmul.f32 %v1433, %v1501
          %v1547 = vmul.f32 %v1434, %v1506
          %v1548 = vmul.f32 %v1435, %v1511
          %v1549 = vmul.f32 %v1436, %v1516
          %v1550 = vmul.f32 %v1437, %v1521
          %v1551 = vmul.f32 %v1438, %v1526
          %v1552 = vmul.f32 %v1439, %v1531
          %v1553 = vmul.f32 %v1440, %v1536
          %1554 = vst [vmem:[%s440] sm:$0xff] %v1538
          %1555 = vst [vmem:[%s440 + $0x8] sm:$0xff] %v1539
          %1556 = vst [vmem:[%s440 + $0x10] sm:$0xff] %v1540
          %1557 = vst [vmem:[%s440 + $0x18] sm:$0xff] %v1541
          %1558 = vst [vmem:[%s440 + $0x20] sm:$0xff] %v1542
          %1559 = vst [vmem:[%s440 + $0x28] sm:$0xff] %v1543
          %1560 = vst [vmem:[%s440 + $0x30] sm:$0xff] %v1544
          %1561 = vst [vmem:[%s440 + $0x38] sm:$0xff] %v1545
          %1562 = vst [vmem:[%s440 + $0x40] sm:$0xff] %v1546
          %1563 = vst [vmem:[%s440 + $0x48] sm:$0xff] %v1547
          %1564 = vst [vmem:[%s440 + $0x50] sm:$0xff] %v1548
          %1565 = vst [vmem:[%s440 + $0x58] sm:$0xff] %v1549
          %1566 = vst [vmem:[%s440 + $0x60] sm:$0xff] %v1550
          %1567 = vst [vmem:[%s440 + $0x68] sm:$0xff] %v1551
          %1568 = vst [vmem:[%s440 + $0x70] sm:$0xff] %v1552
          %1569 = vst [vmem:[%s440 + $0x78] sm:$0xff] %v1553
        $region72: #{sdpa_dropout.1} parent=43 // pred_fallthru
          _
        %s1570 = sand.u32 %s216, 1
        %s1571 = scalar_lea.sflag [#allocation8], %s1570
        %s1572 = sand.u32 %s216, 1
        %s1573 = smul.addr %s1572, 128
        %s1574 = scalar_lea.vmem [#allocation16], %s1573
        // Predicated region
        $region73: #{sdpa_dropout.1} parent=43 // pred_check
          %p1575 = pneg %p226
        $region74: #{sdpa_dropout.1} parent=43 // pred_check_branch
          %1577 = sbr.rel (%p1575) target = $region76
        $region75: #{sdpa_dropout.1} parent=43 // pred_region
          %s1578 = smul.u32 16, %s37
          %s1580 = ssub.s32 2048, 2048
          %1581 = vsyncadd %s1571, %s1580
          %s1582 = smul.addr %s36, 16
          %s1583 = sadd.s32 %s1578, %s1582
          %s1584 = smul.addr %s1583, 128
          %s1585 = scalar_lea.hbm %s6, %s1584
          %s1586 = sshll.u32 %s1574, 4
          %s1587 = int_to_ptr.vmem [resolvable:$true] %s1586
          %1592 = dma.vmem_to_hbm [thread:$0]  %s1587, 2048, %s1585, %s1571, 128, 128, 8
        $region76: #{sdpa_dropout.1} parent=43 // pred_fallthru
          _
      $region44: #{sdpa_dropout.1} parent=5 // pred_fallthru
        _
      %p1593 = scmp.le.s32.totalorder 2, %s26
      // Predicated region
      $region77: #{sdpa_dropout.1} parent=5 // pred_check
        %p1594 = pneg %p1593
      $region78: #{sdpa_dropout.1} parent=5 // pred_check_branch
        %1596 = sbr.rel (%p1594) target = $region80
      $region79: #{sdpa_dropout.1} parent=5 // pred_region
        %s1597 = ssub.s32 %s26, 2
        // Predicated region
        $region81: #{sdpa_dropout.1} parent=79 // pred_check
          %p1598 = pneg %p232
        $region82: #{sdpa_dropout.1} parent=79 // pred_check_branch
          %1600 = sbr.rel (%p1598) target = $region84
        $region83: #{sdpa_dropout.1} parent=79 // pred_region
          %s1601 = sand.u32 %s217, 1
          %s1602 = scalar_lea.sflag [#allocation8], %s1601
          %s1603 = sand.u32 %s217, 1
          %s1604 = smul.addr %s1603, 128
          %s1605 = scalar_lea.vmem [#allocation16], %s1604
          %1606 = dma.done %s1602, 2048
        $region84: #{sdpa_dropout.1} parent=79 // pred_fallthru
          _
      $region80: #{sdpa_dropout.1} parent=5 // pred_fallthru
        _
    $region6: #{sdpa_dropout.1} parent=1 // loop_footer
      %s30 = sadd.s32 1, %s26
    $region7: #{sdpa_dropout.1} parent=1 // loop_footer_branch
      %25 = sbr.rel target = $region3
    $region8: #{sdpa_dropout.1} parent=1 // loop_exit
      _
    %1607 = vsyncpa [#allocation7], 1
    %s1608 = scalar_lea.sflag [#allocation7], 1
    %1609 = vsyncpa %s1608, 1
    %1610 = vsyncpa [#allocation12], 1
    %s1611 = scalar_lea.sflag [#allocation12], 1
    %1612 = vsyncpa %s1611, 1
    %1613 = vsyncpa [#allocation15], 1
    %s1614 = scalar_lea.sflag [#allocation15], 1
    %1615 = vsyncpa %s1614, 1
    %1616 = vsyncpa [#allocation8], 1
    %s1617 = scalar_lea.sflag [#allocation8], 1
    %1618 = vsyncpa %s1617, 1
    %1619 = vsyncpa [#allocation9], 1
    %s1620 = scalar_lea.sflag [#allocation9], 1
    %1621 = vsyncpa %s1620, 1

</llo_original>
